<compile_context>
chip_gen: v7x
topology: tpu7x:2x2x1
jax: 0.10.0
libtpu: 0.0.40
codegen_flags: <defaults>
</compile_context>

<pallas_src>
import jax
import jax.numpy as jnp
from jax import lax
from jax.experimental import pallas as pl
from jax.experimental.pallas import tpu as pltpu


def _round_up(x, m):
    return ((x + m - 1) // m) * m


def _residual_block_kernel(xc_ref, xt_ref, xb_ref, w1_ref, b1_ref, w2_ref,
                           b2_ref, o_ref, xp_ref):
    # xc_ref: (1, TH, W, Cp) bf16 current row tile of x (pre-ReLU; residual)
    # xt_ref: (1, 1,  W, Cp) bf16 row above the tile (index clamped at the top)
    # xb_ref: (1, 1,  W, Cp) bf16 row below the tile (index clamped at bottom)
    # w1_ref: (3, 3*Cp, Cp)  bf16 3x3 conv weight; w1_ref[dy] rows = (dx, cin)
    # b1_ref: (1, Cp) f32 ; w2_ref: (Cp, Cp) bf16 ; b2_ref: (1, Cp) f32
    # o_ref : (1, TH, W, Cp)
    # xp_ref: (TH+2, Wp, Cp) bf16 scratch: width-padded, ReLU'd rows
    r = pl.program_id(1)
    nr = pl.num_programs(1)
    TH, W, Cp = o_ref.shape[1], o_ref.shape[2], o_ref.shape[3]

    xc = xc_ref[0]                                       # (TH, W, Cp) bf16
    # The clamped index_map re-reads an in-image row at the boundaries; mask
    # those halo rows to zero (the conv's zero padding).  ReLU commutes with
    # zero padding since relu(0) == 0.
    top_mask = (r > 0).astype(jnp.float32).astype(xp_ref.dtype)
    bot_mask = (r < nr - 1).astype(jnp.float32).astype(xp_ref.dtype)
    top = jnp.maximum(xt_ref[0], 0.0) * top_mask         # (1, W, Cp)
    bot = jnp.maximum(xb_ref[0], 0.0) * bot_mask

    # Fill the persistent width-padded scratch.  Only the two pad columns that
    # are actually read (0 and W+1) need zeroing; the interior is overwritten
    # every grid step, so no cross-step dependency.
    zcol = jnp.zeros((TH + 2, 1, Cp), dtype=xp_ref.dtype)
    xp_ref[:, 0:1, :] = zcol
    xp_ref[:, W + 1:W + 2, :] = zcol
    xp_ref[0:1, 1:W + 1, :] = top
    xp_ref[1:TH + 1, 1:W + 1, :] = jnp.maximum(xc, 0.0)
    xp_ref[TH + 1:TH + 2, 1:W + 1, :] = bot

    # dx-expanded buffer (3x duplication instead of the 9x im2col slab):
    #   xdx[i, x, dx*Cp + c] == xp[i, x + dx, c]
    xdx = jnp.concatenate(
        [xp_ref[:, 0:W, :], xp_ref[:, 1:W + 1, :], xp_ref[:, 2:W + 2, :]],
        axis=-1)                                         # (TH+2, W, 3*Cp) bf16

    # 3x3 conv = three accumulating MXU matmuls (one per dy), K = 3*Cp.
    acc = jnp.zeros((TH * W, Cp), jnp.float32)
    for dy in range(3):
        lhs = xdx[dy:dy + TH].reshape(TH * W, 3 * Cp)
        acc = acc + jnp.dot(lhs, w1_ref[dy],
                            preferred_element_type=jnp.float32)

    h = jnp.maximum(acc + b1_ref[...], 0.0).astype(jnp.bfloat16)
    out = jnp.dot(h, w2_ref[...], preferred_element_type=jnp.float32)
    out = out + b2_ref[...]
    # Residual connection uses the pre-ReLU input tile (f32 accumulation).
    out = out + xc.reshape(TH * W, Cp).astype(jnp.float32)
    o_ref[...] = out.reshape(1, TH, W, Cp).astype(o_ref.dtype)


def _vmem_capacity_bytes():
    """Per-core VMEM capacity; conservative (v7x) fallback if unavailable."""
    try:
        info = pltpu.get_tpu_info()
        cap = getattr(info, "vmem_capacity_bytes", None)
        if cap:
            return int(cap)
    except Exception:
        pass
    return 64 << 20


def _step_vmem_bytes(th, W, Wp, Cp, out_bytes):
    """Approximate per-grid-step VMEM footprint of the kernel (bytes)."""
    in_b = 2                                    # bf16 activations in HBM
    center = th * W * Cp * in_b * 2             # double-buffered input tile
    halos = 2 * W * Cp * in_b * 2               # two halo rows, double-buffered
    out = th * W * Cp * out_bytes * 2           # double-buffered output tile
    weights = (9 * Cp * Cp + Cp * Cp) * 2 * 2 + 2 * Cp * 4 * 2
    xp = (th + 2) * Wp * Cp * 2                 # padded-rows scratch
    xdx = (th + 2) * W * 3 * Cp * 2             # dx-expanded bf16 buffer
    acc = th * W * Cp * 4                       # f32 conv accumulator
    hid = th * W * Cp * 2                       # bf16 hidden activation
    tmp = th * W * Cp * 4                       # f32 output temporary
    total = center + halos + out + weights + xp + xdx + acc + hid + tmp
    return int(1.25 * total)                    # slack for compiler temporaries


def _pick_row_tile(H, W, Wp, Cp, out_bytes, budget, max_rows=256):
    """Largest divisor of H whose estimated per-step footprint fits budget."""
    best = None
    for th in range(1, min(H, max_rows) + 1):
        if H % th == 0 and _step_vmem_bytes(th, W, Wp, Cp, out_bytes) <= budget:
            best = th
    if best is None:
        raise ValueError(
            "residual_block: even a single-row tile exceeds the VMEM budget "
            f"({_step_vmem_bytes(1, W, Wp, Cp, out_bytes)} > {budget} bytes); "
            "pass an explicit row_tile or split the image along W.")
    return best


def residual_block_nhwc(x_nhwc, w1, b1, w2, b2, *, row_tile=None,
                        out_dtype=None):
    """x_nhwc: (N,H,W,C); w1: (3,3,C,C) HWIO; w2: (C,C) IO; b1,b2: (C,)."""
    N, H, W, C = x_nhwc.shape
    out_dtype = x_nhwc.dtype if out_dtype is None else out_dtype
    Cp = _round_up(C, 128)            # lane-dense channel dimension
    Hp = _round_up(H, 8)              # gives the tile picker usable divisors
    Wp = _round_up(W + 2, 8)          # sublane-aligned padded-width scratch

    pad_c, pad_h = Cp - C, Hp - H
    if pad_c or pad_h:
        x_in = jnp.pad(x_nhwc, ((0, 0), (0, pad_h), (0, 0), (0, pad_c)))
    else:
        x_in = x_nhwc
    # bf16 activation I/O: halves HBM read traffic (center + 2 halos).  In a
    # real model keep activations bf16 end-to-end to avoid this cast pass.
    x_in = x_in.astype(jnp.bfloat16)

    if pad_c:
        w1p = jnp.pad(w1, ((0, 0), (0, 0), (0, pad_c), (0, pad_c)))
        w2p = jnp.pad(w2, ((0, pad_c), (0, pad_c)))
        b1p = jnp.pad(b1, ((0, pad_c),))
        b2p = jnp.pad(b2, ((0, pad_c),))
    else:
        w1p, w2p, b1p, b2p = w1, w2, b1, b2

    # w1 as 3 dy-blocks of (3*Cp, Cp); rows within a block ordered (dx, cin).
    w1_mat = w1p.reshape(3, 3 * Cp, Cp).astype(jnp.bfloat16)
    w2_mat = w2p.astype(jnp.bfloat16)
    b1_2d = b1p.reshape(1, Cp).astype(jnp.float32)
    b2_2d = b2p.reshape(1, Cp).astype(jnp.float32)

    cap = _vmem_capacity_bytes()
    vmem_limit = min(cap * 3 // 4, 100 << 20)   # 48 MiB on v7x, 96 MiB on v5e/v6e
    budget = min(cap // 2, 64 << 20)
    out_bytes = jnp.dtype(out_dtype).itemsize

    if row_tile is None:
        TH = _pick_row_tile(Hp, W, Wp, Cp, out_bytes, budget)
    else:
        TH = row_tile
        assert Hp % TH == 0, "row_tile must divide the (padded) image height"
    n_rows = Hp // TH

    center = pl.BlockSpec((1, TH, W, Cp), lambda n, r: (n, r, 0, 0))
    halo_top = pl.BlockSpec(
        (1, 1, W, Cp), lambda n, r: (n, jnp.maximum(r * TH - 1, 0), 0, 0))
    halo_bot = pl.BlockSpec(
        (1, 1, W, Cp), lambda n, r: (n, jnp.minimum(r * TH + TH, Hp - 1), 0, 0))

    out = pl.pallas_call(
        _residual_block_kernel,
        out_shape=jax.ShapeDtypeStruct((N, Hp, W, Cp), out_dtype),
        grid_spec=pltpu.PrefetchScalarGridSpec(
            num_scalar_prefetch=0,
            grid=(N, n_rows),
            in_specs=[
                center, halo_top, halo_bot,
                pl.BlockSpec((3, 3 * Cp, Cp), lambda n, r: (0, 0, 0)),
                pl.BlockSpec((1, Cp), lambda n, r: (0, 0)),
                pl.BlockSpec((Cp, Cp), lambda n, r: (0, 0)),
                pl.BlockSpec((1, Cp), lambda n, r: (0, 0)),
            ],
            out_specs=pl.BlockSpec((1, TH, W, Cp), lambda n, r: (n, r, 0, 0)),
            scratch_shapes=[pltpu.VMEM((TH + 2, Wp, Cp), jnp.bfloat16)],
        ),
        compiler_params=pltpu.CompilerParams(
            dimension_semantics=("parallel", "parallel"),
            vmem_limit_bytes=vmem_limit),
    )(x_in, x_in, x_in, w1_mat, b1_2d, w2_mat, b2_2d)

    if pad_c or pad_h:
        out = out[:, :H, :, :C]
    return out


def residual_block(x_nchw, w1, b1, w2, b2, *, row_tile=None, out_dtype=None):
    """PyTorch-convention NCHW wrapper.  Prefer residual_block_nhwc directly
    (keeps the model in NHWC / bf16 and avoids extra HBM transpose passes)."""
    out = residual_block_nhwc(jnp.transpose(x_nchw, (0, 2, 3, 1)),
                              w1, b1, w2, b2, row_tile=row_tile,
                              out_dtype=out_dtype)
    return jnp.transpose(out, (0, 3, 1, 2))


def residual_block_reference(x_nchw, w1, b1, w2, b2):
    """Pure-JAX f32 reference for correctness checking."""
    x = jnp.transpose(x_nchw, (0, 2, 3, 1))
    h = jnp.maximum(x, 0.0)
    h = lax.conv_general_dilated(
        h, w1, window_strides=(1, 1), padding="SAME",
        dimension_numbers=("NHWC", "HWIO", "NHWC")) + b1
    h = jnp.maximum(h, 0.0)
    h = jnp.einsum("nhwc,cd->nhwd", h, w2) + b2
    out = x + h
    return jnp.transpose(out, (0, 3, 1, 2))


if __name__ == "__main__":
    # Small deterministic setup: batch=2, channels=4, spatial=16x16.
    N, C, H, W = 2, 4, 16, 16
    key = jax.random.PRNGKey(0)
    kx, k1, kb1, k2, kb2 = jax.random.split(key, 5)

    x = jax.random.normal(kx, (N, C, H, W), dtype=jnp.float32)
    w1 = 0.1 * jax.random.normal(k1, (3, 3, C, C), dtype=jnp.float32)  # 3x3 HWIO
    b1 = 0.1 * jax.random.normal(kb1, (C,), dtype=jnp.float32)
    w2 = 0.1 * jax.random.normal(k2, (C, C), dtype=jnp.float32)        # 1x1 IO
    b2 = 0.1 * jax.random.normal(kb2, (C,), dtype=jnp.float32)

    ref = residual_block_reference(x, w1, b1, w2, b2)

    # Multi-row-tile path: exercises halo clamping/masking across tiles.
    out = jax.block_until_ready(residual_block(x, w1, b1, w2, b2, row_tile=4))
    assert out.shape == (N, C, H, W)
    assert jnp.allclose(out, ref, atol=5e-2, rtol=5e-2), (
        "mismatch vs reference (row_tile=4), max abs err "
        f"{jnp.max(jnp.abs(out - ref))}")

    # Auto row tile (footprint-aware picker; single tile for this small image).
    out2 = jax.block_until_ready(residual_block(x, w1, b1, w2, b2))
    assert jnp.allclose(out2, ref, atol=5e-2, rtol=5e-2), (
        "mismatch vs reference (auto tile), max abs err "
        f"{jnp.max(jnp.abs(out2 - ref))}")

    print("KERNEL_OK")
</pallas_src>

<mosaic_0001>
module attributes {stable_mosaic.version = 11 : i64} {
  func.func @_residual_block_kernel(%arg0: i32, %arg1: i32, %arg2: memref<1x4x16x128xbf16, #tpu.memory_space<vmem>>, %arg3: memref<1x1x16x128xbf16, #tpu.memory_space<vmem>>, %arg4: memref<1x1x16x128xbf16, #tpu.memory_space<vmem>>, %arg5: memref<3x384x128xbf16, #tpu.memory_space<vmem>>, %arg6: memref<1x128xf32, #tpu.memory_space<vmem>>, %arg7: memref<128x128xbf16, #tpu.memory_space<vmem>>, %arg8: memref<1x128xf32, #tpu.memory_space<vmem>>, %arg9: memref<1x4x16x128xf32, #tpu.memory_space<vmem>>, %arg10: memref<6x24x128xbf16, #tpu.memory_space<vmem>>) attributes {dimension_semantics = [#tpu.dimension_semantics<parallel>, #tpu.dimension_semantics<parallel>], iteration_bounds = array<i64: 2, 4>, scalar_prefetch = 0 : i64, scratch_operands = 1 : i64, tpu.core_type = #tpu.core_type<tc>, window_params = [{transform_indices = @transform_0, window_bounds = array<i64: 1, 4, 16, 128>}, {transform_indices = @transform_1, window_bounds = array<i64: 1, 1, 16, 128>}, {transform_indices = @transform_2, window_bounds = array<i64: 1, 1, 16, 128>}, {pipeline_mode = #tpu.pipeline_mode<synchronous>, transform_indices = @transform_3, window_bounds = array<i64: 3, 384, 128>}, {pipeline_mode = #tpu.pipeline_mode<synchronous>, transform_indices = @transform_4, window_bounds = array<i64: 1, 128>}, {pipeline_mode = #tpu.pipeline_mode<synchronous>, transform_indices = @transform_5, window_bounds = array<i64: 128, 128>}, {pipeline_mode = #tpu.pipeline_mode<synchronous>, transform_indices = @transform_6, window_bounds = array<i64: 1, 128>}, {transform_indices = @transform_7, window_bounds = array<i64: 1, 4, 16, 128>}]} {
    %c0 = arith.constant 0 : index
    %c0_0 = arith.constant 0 : index
    %c0_1 = arith.constant 0 : index
    %c0_2 = arith.constant 0 : index
    %0 = vector.load %arg2[%c0, %c0_0, %c0_1, %c0_2] : memref<1x4x16x128xbf16, #tpu.memory_space<vmem>>, vector<1x4x16x128xbf16>
    %1 = vector.shape_cast %0 : vector<1x4x16x128xbf16> to vector<4x16x128xbf16>
    %c0_i32 = arith.constant 0 : i32
    %2 = arith.cmpi sgt, %arg1, %c0_i32 : i32
    %3 = arith.extui %2 : i1 to i32
    %4 = arith.sitofp %3 : i32 to f32
    %5 = arith.truncf %4 : f32 to bf16
    %c3_i32 = arith.constant 3 : i32
    %6 = arith.cmpi slt, %arg1, %c3_i32 : i32
    %7 = arith.extui %6 : i1 to i32
    %8 = arith.sitofp %7 : i32 to f32
    %9 = arith.truncf %8 : f32 to bf16
    %c0_3 = arith.constant 0 : index
    %c0_4 = arith.constant 0 : index
    %c0_5 = arith.constant 0 : index
    %c0_6 = arith.constant 0 : index
    %10 = vector.load %arg3[%c0_3, %c0_4, %c0_5, %c0_6] : memref<1x1x16x128xbf16, #tpu.memory_space<vmem>>, vector<1x1x16x128xbf16>
    %11 = vector.shape_cast %10 : vector<1x1x16x128xbf16> to vector<1x16x128xbf16>
    %cst = arith.constant 0.000000e+00 : bf16
    %12 = vector.broadcast %cst : bf16 to vector<1x16x128xbf16>
    %13 = arith.maximumf %11, %12 : vector<1x16x128xbf16>
    %14 = vector.broadcast %5 : bf16 to vector<1x16x128xbf16>
    %15 = arith.mulf %13, %14 : vector<1x16x128xbf16>
    %c0_7 = arith.constant 0 : index
    %c0_8 = arith.constant 0 : index
    %c0_9 = arith.constant 0 : index
    %c0_10 = arith.constant 0 : index
    %16 = vector.load %arg4[%c0_7, %c0_8, %c0_9, %c0_10] : memref<1x1x16x128xbf16, #tpu.memory_space<vmem>>, vector<1x1x16x128xbf16>
    %17 = vector.shape_cast %16 : vector<1x1x16x128xbf16> to vector<1x16x128xbf16>
    %cst_11 = arith.constant 0.000000e+00 : bf16
    %18 = vector.broadcast %cst_11 : bf16 to vector<1x16x128xbf16>
    %19 = arith.maximumf %17, %18 : vector<1x16x128xbf16>
    %20 = vector.broadcast %9 : bf16 to vector<1x16x128xbf16>
    %21 = arith.mulf %19, %20 : vector<1x16x128xbf16>
    %cst_12 = arith.constant 0.000000e+00 : bf16
    %22 = vector.broadcast %cst_12 : bf16 to vector<6x1x128xbf16>
    %c0_13 = arith.constant 0 : index
    %c0_14 = arith.constant 0 : index
    %c0_15 = arith.constant 0 : index
    %23 = vector.load %arg10[%c0_13, %c0_14, %c0_15] : memref<6x24x128xbf16, #tpu.memory_space<vmem>>, vector<6x1x128xbf16>
    tpu.vector_store %arg10[%c0_13, %c0_14, %c0_15], %22 {strides = array<i32>} : memref<6x24x128xbf16, #tpu.memory_space<vmem>>, vector<6x1x128xbf16>,
    %c0_16 = arith.constant 0 : index
    %c17 = arith.constant 17 : index
    %c0_17 = arith.constant 0 : index
    %24 = vector.load %arg10[%c0_16, %c17, %c0_17] : memref<6x24x128xbf16, #tpu.memory_space<vmem>>, vector<6x1x128xbf16>
    tpu.vector_store %arg10[%c0_16, %c17, %c0_17], %22 {strides = array<i32>} : memref<6x24x128xbf16, #tpu.memory_space<vmem>>, vector<6x1x128xbf16>,
    %c0_18 = arith.constant 0 : index
    %c1 = arith.constant 1 : index
    %c0_19 = arith.constant 0 : index
    %25 = vector.load %arg10[%c0_18, %c1, %c0_19] : memref<6x24x128xbf16, #tpu.memory_space<vmem>>, vector<1x16x128xbf16>
    tpu.vector_store %arg10[%c0_18, %c1, %c0_19], %15 {strides = array<i32>} : memref<6x24x128xbf16, #tpu.memory_space<vmem>>, vector<1x16x128xbf16>,
    %cst_20 = arith.constant 0.000000e+00 : bf16
    %26 = vector.broadcast %cst_20 : bf16 to vector<4x16x128xbf16>
    %27 = arith.maximumf %1, %26 : vector<4x16x128xbf16>
    %c1_21 = arith.constant 1 : index
    %c1_22 = arith.constant 1 : index
    %c0_23 = arith.constant 0 : index
    %28 = vector.load %arg10[%c1_21, %c1_22, %c0_23] : memref<6x24x128xbf16, #tpu.memory_space<vmem>>, vector<4x16x128xbf16>
    tpu.vector_store %arg10[%c1_21, %c1_22, %c0_23], %27 {strides = array<i32>} : memref<6x24x128xbf16, #tpu.memory_space<vmem>>, vector<4x16x128xbf16>,
    %c5 = arith.constant 5 : index
    %c1_24 = arith.constant 1 : index
    %c0_25 = arith.constant 0 : index
    %29 = vector.load %arg10[%c5, %c1_24, %c0_25] : memref<6x24x128xbf16, #tpu.memory_space<vmem>>, vector<1x16x128xbf16>
    tpu.vector_store %arg10[%c5, %c1_24, %c0_25], %21 {strides = array<i32>} : memref<6x24x128xbf16, #tpu.memory_space<vmem>>, vector<1x16x128xbf16>,
    %c0_26 = arith.constant 0 : index
    %c0_27 = arith.constant 0 : index
    %c0_28 = arith.constant 0 : index
    %30 = vector.load %arg10[%c0_26, %c0_27, %c0_28] : memref<6x24x128xbf16, #tpu.memory_space<vmem>>, vector<6x16x128xbf16>
    %c0_29 = arith.constant 0 : index
    %c1_30 = arith.constant 1 : index
    %c0_31 = arith.constant 0 : index
    %31 = vector.load %arg10[%c0_29, %c1_30, %c0_31] : memref<6x24x128xbf16, #tpu.memory_space<vmem>>, vector<6x16x128xbf16>
    %c0_32 = arith.constant 0 : index
    %c2 = arith.constant 2 : index
    %c0_33 = arith.constant 0 : index
    %32 = vector.load %arg10[%c0_32, %c2, %c0_33] : memref<6x24x128xbf16, #tpu.memory_space<vmem>>, vector<6x16x128xbf16>
    %33 = tpu.concatenate %30, %31, %32 in 2 : vector<6x16x128xbf16>, vector<6x16x128xbf16>, vector<6x16x128xbf16> -> vector<6x16x384xbf16>
    %cst_34 = arith.constant 0.000000e+00 : f32
    %34 = vector.broadcast %cst_34 : f32 to vector<64x128xf32>
    %35 = vector.extract_strided_slice %33 {offsets = [0, 0, 0], sizes = [4, 16, 384], strides = [1, 1, 1]} : vector<6x16x384xbf16> to vector<4x16x384xbf16>
    %36 = vector.shape_cast %35 : vector<4x16x384xbf16> to vector<64x384xbf16>
    %c0_35 = arith.constant 0 : index
    %c0_36 = arith.constant 0 : index
    %c0_37 = arith.constant 0 : index
    %37 = vector.load %arg5[%c0_35, %c0_36, %c0_37] : memref<3x384x128xbf16, #tpu.memory_space<vmem>>, vector<1x384x128xbf16>
    %38 = vector.shape_cast %37 : vector<1x384x128xbf16> to vector<384x128xbf16>
    %cst_38 = arith.constant dense<0.000000e+00> : vector<64x128xf32>
    %39 = tpu.matmul %36, %38, %cst_38 {dimension_numbers = #tpu.dot_dimension_numbers<[1], [0], [0], [1], [0, 0, 1, 1], [], []>} : vector<64x384xbf16>, vector<384x128xbf16>, vector<64x128xf32> -> vector<64x128xf32>
    %40 = arith.addf %34, %39 : vector<64x128xf32>
    %41 = vector.extract_strided_slice %33 {offsets = [1, 0, 0], sizes = [4, 16, 384], strides = [1, 1, 1]} : vector<6x16x384xbf16> to vector<4x16x384xbf16>
    %42 = vector.shape_cast %41 : vector<4x16x384xbf16> to vector<64x384xbf16>
    %c1_39 = arith.constant 1 : index
    %c0_40 = arith.constant 0 : index
    %c0_41 = arith.constant 0 : index
    %43 = vector.load %arg5[%c1_39, %c0_40, %c0_41] : memref<3x384x128xbf16, #tpu.memory_space<vmem>>, vector<1x384x128xbf16>
    %44 = vector.shape_cast %43 : vector<1x384x128xbf16> to vector<384x128xbf16>
    %cst_42 = arith.constant dense<0.000000e+00> : vector<64x128xf32>
    %45 = tpu.matmul %42, %44, %cst_42 {dimension_numbers = #tpu.dot_dimension_numbers<[1], [0], [0], [1], [0, 0, 1, 1], [], []>} : vector<64x384xbf16>, vector<384x128xbf16>, vector<64x128xf32> -> vector<64x128xf32>
    %46 = arith.addf %40, %45 : vector<64x128xf32>
    %47 = vector.extract_strided_slice %33 {offsets = [2, 0, 0], sizes = [4, 16, 384], strides = [1, 1, 1]} : vector<6x16x384xbf16> to vector<4x16x384xbf16>
    %48 = vector.shape_cast %47 : vector<4x16x384xbf16> to vector<64x384xbf16>
    %c2_43 = arith.constant 2 : index
    %c0_44 = arith.constant 0 : index
    %c0_45 = arith.constant 0 : index
    %49 = vector.load %arg5[%c2_43, %c0_44, %c0_45] : memref<3x384x128xbf16, #tpu.memory_space<vmem>>, vector<1x384x128xbf16>
    %50 = vector.shape_cast %49 : vector<1x384x128xbf16> to vector<384x128xbf16>
    %cst_46 = arith.constant dense<0.000000e+00> : vector<64x128xf32>
    %51 = tpu.matmul %48, %50, %cst_46 {dimension_numbers = #tpu.dot_dimension_numbers<[1], [0], [0], [1], [0, 0, 1, 1], [], []>} : vector<64x384xbf16>, vector<384x128xbf16>, vector<64x128xf32> -> vector<64x128xf32>
    %52 = arith.addf %46, %51 : vector<64x128xf32>
    %c0_47 = arith.constant 0 : index
    %c0_48 = arith.constant 0 : index
    %53 = vector.load %arg6[%c0_47, %c0_48] : memref<1x128xf32, #tpu.memory_space<vmem>>, vector<1x128xf32>
    %54 = vector.broadcast %53 : vector<1x128xf32> to vector<64x128xf32>
    %55 = arith.addf %52, %54 : vector<64x128xf32>
    %cst_49 = arith.constant 0.000000e+00 : f32
    %56 = vector.broadcast %cst_49 : f32 to vector<64x128xf32>
    %57 = arith.maximumf %55, %56 : vector<64x128xf32>
    %58 = arith.truncf %57 : vector<64x128xf32> to vector<64x128xbf16>
    %c0_50 = arith.constant 0 : index
    %c0_51 = arith.constant 0 : index
    %59 = vector.load %arg7[%c0_50, %c0_51] : memref<128x128xbf16, #tpu.memory_space<vmem>>, vector<128x128xbf16>
    %cst_52 = arith.constant dense<0.000000e+00> : vector<64x128xf32>
    %60 = tpu.matmul %58, %59, %cst_52 {dimension_numbers = #tpu.dot_dimension_numbers<[1], [0], [0], [1], [0, 0, 1, 1], [], []>} : vector<64x128xbf16>, vector<128x128xbf16>, vector<64x128xf32> -> vector<64x128xf32>
    %c0_53 = arith.constant 0 : index
    %c0_54 = arith.constant 0 : index
    %61 = vector.load %arg8[%c0_53, %c0_54] : memref<1x128xf32, #tpu.memory_space<vmem>>, vector<1x128xf32>
    %62 = vector.broadcast %61 : vector<1x128xf32> to vector<64x128xf32>
    %63 = arith.addf %60, %62 : vector<64x128xf32>
    %64 = vector.shape_cast %1 : vector<4x16x128xbf16> to vector<64x128xbf16>
    %65 = arith.extf %64 : vector<64x128xbf16> to vector<64x128xf32>
    %66 = arith.addf %63, %65 : vector<64x128xf32>
    %67 = vector.shape_cast %66 : vector<64x128xf32> to vector<1x4x16x128xf32>
    %c0_55 = arith.constant 0 : index
    %c0_56 = arith.constant 0 : index
    %c0_57 = arith.constant 0 : index
    %c0_58 = arith.constant 0 : index
    %68 = vector.load %arg9[%c0_55, %c0_56, %c0_57, %c0_58] : memref<1x4x16x128xf32, #tpu.memory_space<vmem>>, vector<1x4x16x128xf32>
    tpu.vector_store %arg9[%c0_55, %c0_56, %c0_57, %c0_58], %67 {strides = array<i32>} : memref<1x4x16x128xf32, #tpu.memory_space<vmem>>, vector<1x4x16x128xf32>,
    return
  }
  func.func @transform_0(%arg0: i32, %arg1: i32) -> (i32, i32, i32, i32) {
    %c0_i32 = arith.constant 0 : i32
    %c0_i32_0 = arith.constant 0 : i32
    %c0_i32_1 = arith.constant 0 : i32
    return %arg0, %arg1, %c0_i32, %c0_i32_0 : i32, i32, i32, i32
  }
  func.func @transform_1(%arg0: i32, %arg1: i32) -> (i32, i32, i32, i32) {
    %c4_i32 = arith.constant 4 : i32
    %0 = arith.muli %arg1, %c4_i32 : i32
    %c1_i32 = arith.constant 1 : i32
    %1 = arith.subi %0, %c1_i32 : i32
    %c0_i32 = arith.constant 0 : i32
    %2 = arith.maxsi %1, %c0_i32 : i32
    %c0_i32_0 = arith.constant 0 : i32
    %c0_i32_1 = arith.constant 0 : i32
    %c0_i32_2 = arith.constant 0 : i32
    return %arg0, %2, %c0_i32_0, %c0_i32_1 : i32, i32, i32, i32
  }
  func.func @transform_2(%arg0: i32, %arg1: i32) -> (i32, i32, i32, i32) {
    %c4_i32 = arith.constant 4 : i32
    %0 = arith.muli %arg1, %c4_i32 : i32
    %c4_i32_0 = arith.constant 4 : i32
    %1 = arith.addi %0, %c4_i32_0 : i32
    %c15_i32 = arith.constant 15 : i32
    %2 = arith.minsi %1, %c15_i32 : i32
    %c0_i32 = arith.constant 0 : i32
    %c0_i32_1 = arith.constant 0 : i32
    %c0_i32_2 = arith.constant 0 : i32
    return %arg0, %2, %c0_i32, %c0_i32_1 : i32, i32, i32, i32
  }
  func.func @transform_3(%arg0: i32, %arg1: i32) -> (i32, i32, i32) {
    %c0_i32 = arith.constant 0 : i32
    %c0_i32_0 = arith.constant 0 : i32
    %c0_i32_1 = arith.constant 0 : i32
    %c0_i32_2 = arith.constant 0 : i32
    return %c0_i32, %c0_i32_0, %c0_i32_1 : i32, i32, i32
  }
  func.func @transform_4(%arg0: i32, %arg1: i32) -> (i32, i32) {
    %c0_i32 = arith.constant 0 : i32
    %c0_i32_0 = arith.constant 0 : i32
    %c0_i32_1 = arith.constant 0 : i32
    return %c0_i32, %c0_i32_0 : i32, i32
  }
  func.func @transform_5(%arg0: i32, %arg1: i32) -> (i32, i32) {
    %c0_i32 = arith.constant 0 : i32
    %c0_i32_0 = arith.constant 0 : i32
    %c0_i32_1 = arith.constant 0 : i32
    return %c0_i32, %c0_i32_0 : i32, i32
  }
  func.func @transform_6(%arg0: i32, %arg1: i32) -> (i32, i32) {
    %c0_i32 = arith.constant 0 : i32
    %c0_i32_0 = arith.constant 0 : i32
    %c0_i32_1 = arith.constant 0 : i32
    return %c0_i32, %c0_i32_0 : i32, i32
  }
  func.func @transform_7(%arg0: i32, %arg1: i32) -> (i32, i32, i32, i32) {
    %c0_i32 = arith.constant 0 : i32
    %c0_i32_0 = arith.constant 0 : i32
    %c0_i32_1 = arith.constant 0 : i32
    return %arg0, %arg1, %c0_i32, %c0_i32_0 : i32, i32, i32, i32
  }
}

</mosaic_0001>

<llo_original>
// kernel: tpu_custom_call.1
$region0: #{tpu_custom_call.1}
  #allocation0 [shape = 'u32[]', space=smem, size = 0x4, offset = 0x4, fixed_abs, tag = 'smem constant byte address 0x4 - core index']
  #allocation1 [shape = 'u32[144,128]{1,0:T(1,128)}', space=vmem, size = 0x12000, scoped, tag = 'internal scratch']
  #allocation2 [shape = 'bf16[6,24,128]{2,1,0:T(8,128)(2,1)}', space=vmem, size = 0x9000, scoped, tag = 'scratch operand']
  %s0 = inlined_call_operand.hbm [shape: bf16[2,16,16,128], index: 0, kind: input, shape index: {}]
  %s1 = inlined_call_operand.hbm [shape: bf16[2,16,16,128], index: 1, kind: input, shape index: {}]
  %s2 = inlined_call_operand.hbm [shape: bf16[2,16,16,128], index: 2, kind: input, shape index: {}]
  %s3 = inlined_call_operand.hbm [shape: bf16[3,384,128], index: 3, kind: input, shape index: {}]
  %s4 = inlined_call_operand.vmem [shape: f32[1,128], index: 4, kind: input, shape index: {}]
  %s5 = inlined_call_operand.hbm [shape: bf16[128,128], index: 5, kind: input, shape index: {}]
  %s6 = inlined_call_operand.vmem [shape: f32[1,128], index: 6, kind: input, shape index: {}]
  %s7 = inlined_call_operand.hbm [shape: f32[2,16,16,128], index: 7, kind: output, shape index: {}]
  %s8 = sld [smem:[#allocation0]]
  $region81: #{tpu_custom_call.1} parent=0
    _
  %s10 = ssub.s32 1, %s8
  %s11 = scalar_select 0, %s10, %s8
  $region1: #{tpu_custom_call.1} parent=0
    #allocation3 [shape = 'u8[32768]{0}', space=vmem, size = 0x8000, scoped, tag = 'input window, operand 0']
    #allocation4 [shape = 's32[2]{0}', space=sflag, size = 0x8, scoped, tag = 'scoped memory for tpu_custom_call.1']
    #allocation5 [shape = 's32[2]{0}', space=sflag, size = 0x8, scoped, tag = 'scoped memory for tpu_custom_call.1']
    #allocation6 [shape = 'u8[8192]{0}', space=vmem, size = 0x2000, scoped, tag = 'input window, operand 1']
    #allocation7 [shape = 's32[2]{0}', space=sflag, size = 0x8, scoped, tag = 'scoped memory for tpu_custom_call.1']
    #allocation8 [shape = 'u8[8192]{0}', space=vmem, size = 0x2000, scoped, tag = 'input window, operand 2']
    #allocation9 [shape = 'u8[294912]{0}', space=vmem, size = 0x48000, scoped, tag = 'input window, operand 3, single buffered']
    #allocation10 [shape = 's32[1]{0}', space=sflag, size = 0x4, scoped, tag = 'scoped memory for tpu_custom_call.1']
    #allocation11 [shape = 'u8[32768]{0}', space=vmem, size = 0x8000, scoped, tag = 'input window, operand 5, single buffered']
    #allocation12 [shape = 'u8[65536]{0}', space=vmem, size = 0x10000, scoped, tag = 'output window, operand 0']
    %12 = vsyncpa [#allocation4], 0
    %s13 = scalar_lea.sflag [#allocation4], 1
    %14 = vsyncpa %s13, 0
    %15 = vsyncpa [#allocation7], 0
    %s16 = scalar_lea.sflag [#allocation7], 1
    %17 = vsyncpa %s16, 0
    %18 = vsyncpa [#allocation10], 0
    %19 = vsyncpa [#allocation5], 0
    %s20 = scalar_lea.sflag [#allocation5], 1
    %21 = vsyncpa %s20, 0
    loop: start=0, step=1, limit=10
    $region2: #{tpu_custom_call.1} parent=1 // loop_pre_header
      _
    $region3: #{tpu_custom_call.1} parent=1 // loop_header
      %s23 = sphi 0, %s27
      %p24 = scmp.ge.s32.totalorder %s23, 10
      %s30 = sphi 0, %s42
      %s31 = sphi 0, %s38
      %s32 = sphi 0, %s30
      %s33 = sphi 0, %s31
      %s34 = sphi 0, %s32
      %s35 = sphi 0, %s33
      %s47 = sphi 0, %s49
      %s50 = sphi 0, %s47
      %s51 = sphi 0, %s50
      %s67 = sphi 0, %s51
      %s83 = sphi 0, %s85
      %s86 = sphi 0, %s83
      %s87 = sphi 0, %s86
      %s103 = sphi 0, %s87
      %s119 = sphi 0, %s121
      %s122 = sphi 0, %s119
      %s123 = sphi 0, %s122
      %s139 = sphi 0, %s123
      %s143 = sphi 0, %s143
      %s145 = sphi 0, %s143
      %s146 = sphi 0, %s145
      %s160 = sphi 0, %s146
      %s164 = sphi 0, %s164
      %s166 = sphi 0, %s164
      %s167 = sphi 0, %s166
      %s181 = sphi 0, %s167
      %s185 = sphi 0, %s185
      %s187 = sphi 0, %s185
      %s188 = sphi 0, %s187
      %s202 = sphi 0, %s188
      %s206 = sphi 0, %s206
      %s208 = sphi 0, %s206
      %s209 = sphi 0, %s208
      %s223 = sphi 0, %s209
      %s231 = sphi 0, %s233
      %s234 = sphi 0, %s231
      %s235 = sphi 0, %s234
      %s251 = sphi 0, %s235
    $region4: #{tpu_custom_call.1} parent=1 // loop_header_branch
      %26 = sbr.rel (%p24) target = $region8
    $region5: #{tpu_custom_call.1} parent=1 // loop_body
      %s28 = ssub.s32 %s23, 1
      %s29 = ssub.s32 %s23, 2
      %s36 = sadd.s32 1, %s31
      %p37 = scmp.ge.s32.totalorder %s36, 4
      %s38 = scalar_select %p37, 0, %s36
      %s39 = sadd.s32 1, %s30
      %s40 = scalar_select %p37, %s39, %s30
      %p41 = scmp.ge.s32.totalorder %s40, 2
      %s42 = scalar_select %p41, 0, %s40
      %s43 = ssub.s32 %s30, %s42
      %s44 = ssub.s32 %s31, %s38
      %s45 = sor.u32 %s43, %s44
      %p46 = scmp.eq.s32.totalorder %s45, 0
      %s48 = sadd.s32 %s47, 1
      %s49 = scalar_select %p46, %s47, %s48
      %p52 = pneg %p46
      %p53 = scmp.eq.s32.totalorder %s23, 7
      %p54 = por %p52, %p53
      %p55 = scmp.ne.s32.totalorder %s47, %s50
      %p56 = scmp.eq.s32.totalorder %s23, 0
      %p57 = por %p55, %p56
      %p58 = scmp.ne.s32.totalorder %s47, %s50
      %p59 = scmp.eq.s32.totalorder %s28, 7
      %p60 = por %p58, %p59
      %p61 = scmp.ne.s32.totalorder %s50, %s51
      %p62 = scmp.eq.s32.totalorder %s28, 0
      %p63 = por %p61, %p62
      %p64 = scmp.ne.s32.totalorder %s50, %s51
      %p65 = scmp.eq.s32.totalorder %s29, 7
      %p66 = por %p64, %p65
      %p68 = scmp.ne.s32.totalorder %s51, %s67
      %p69 = scmp.eq.s32.totalorder %s29, 0
      %p70 = por %p68, %p69
      %s71 = smul.u32 %s31, 4
      %s72 = ssub.s32 %s71, 1
      %p73 = scmp.gt.s32.totalorder %s72, 0
      %s74 = scalar_select %p73, %s72, 0
      %s75 = smul.u32 %s38, 4
      %s76 = ssub.s32 %s75, 1
      %p77 = scmp.gt.s32.totalorder %s76, 0
      %s78 = scalar_select %p77, %s76, 0
      %s79 = ssub.s32 %s30, %s42
      %s80 = ssub.s32 %s74, %s78
      %s81 = sor.u32 %s79, %s80
      %p82 = scmp.eq.s32.totalorder %s81, 0
      %s84 = sadd.s32 %s83, 1
      %s85 = scalar_select %p82, %s83, %s84
      %p88 = pneg %p82
      %p89 = scmp.eq.s32.totalorder %s23, 7
      %p90 = por %p88, %p89
      %p91 = scmp.ne.s32.totalorder %s83, %s86
      %p92 = scmp.eq.s32.totalorder %s23, 0
      %p93 = por %p91, %p92
      %p94 = scmp.ne.s32.totalorder %s83, %s86
      %p95 = scmp.eq.s32.totalorder %s28, 7
      %p96 = por %p94, %p95
      %p97 = scmp.ne.s32.totalorder %s86, %s87
      %p98 = scmp.eq.s32.totalorder %s28, 0
      %p99 = por %p97, %p98
      %p100 = scmp.ne.s32.totalorder %s86, %s87
      %p101 = scmp.eq.s32.totalorder %s29, 7
      %p102 = por %p100, %p101
      %p104 = scmp.ne.s32.totalorder %s87, %s103
      %p105 = scmp.eq.s32.totalorder %s29, 0
      %p106 = por %p104, %p105
      %s107 = smul.u32 %s31, 4
      %s108 = sadd.s32 %s107, 4
      %p109 = scmp.lt.s32.totalorder %s108, 15
      %s110 = scalar_select %p109, %s108, 15
      %s111 = smul.u32 %s38, 4
      %s112 = sadd.s32 %s111, 4
      %p113 = scmp.lt.s32.totalorder %s112, 15
      %s114 = scalar_select %p113, %s112, 15
      %s115 = ssub.s32 %s30, %s42
      %s116 = ssub.s32 %s110, %s114
      %s117 = sor.u32 %s115, %s116
      %p118 = scmp.eq.s32.totalorder %s117, 0
      %s120 = sadd.s32 %s119, 1
      %s121 = scalar_select %p118, %s119, %s120
      %p124 = pneg %p118
      %p125 = scmp.eq.s32.totalorder %s23, 7
      %p126 = por %p124, %p125
      %p127 = scmp.ne.s32.totalorder %s119, %s122
      %p128 = scmp.eq.s32.totalorder %s23, 0
      %p129 = por %p127, %p128
      %p130 = scmp.ne.s32.totalorder %s119, %s122
      %p131 = scmp.eq.s32.totalorder %s28, 7
      %p132 = por %p130, %p131
      %p133 = scmp.ne.s32.totalorder %s122, %s123
      %p134 = scmp.eq.s32.totalorder %s28, 0
      %p135 = por %p133, %p134
      %p136 = scmp.ne.s32.totalorder %s122, %s123
      %p137 = scmp.eq.s32.totalorder %s29, 7
      %p138 = por %p136, %p137
      %p140 = scmp.ne.s32.totalorder %s123, %s139
      %p141 = scmp.eq.s32.totalorder %s29, 0
      %p142 = por %p140, %p141
      %s144 = sadd.s32 %s143, 1
      %p147 = scmp.eq.s32.totalorder %s23, 7
      %p148 = scmp.ne.s32.totalorder %s143, %s145
      %p149 = scmp.eq.s32.totalorder %s23, 0
      %p150 = por %p148, %p149
      %p151 = scmp.ne.s32.totalorder %s143, %s145
      %p152 = scmp.eq.s32.totalorder %s28, 7
      %p153 = por %p151, %p152
      %p154 = scmp.ne.s32.totalorder %s145, %s146
      %p155 = scmp.eq.s32.totalorder %s28, 0
      %p156 = por %p154, %p155
      %p157 = scmp.ne.s32.totalorder %s145, %s146
      %p158 = scmp.eq.s32.totalorder %s29, 7
      %p159 = por %p157, %p158
      %p161 = scmp.ne.s32.totalorder %s146, %s160
      %p162 = scmp.eq.s32.totalorder %s29, 0
      %p163 = por %p161, %p162
      %s165 = sadd.s32 %s164, 1
      %p168 = scmp.eq.s32.totalorder %s23, 7
      %p169 = scmp.ne.s32.totalorder %s164, %s166
      %p170 = scmp.eq.s32.totalorder %s23, 0
      %p171 = por %p169, %p170
      %p172 = scmp.ne.s32.totalorder %s164, %s166
      %p173 = scmp.eq.s32.totalorder %s28, 7
      %p174 = por %p172, %p173
      %p175 = scmp.ne.s32.totalorder %s166, %s167
      %p176 = scmp.eq.s32.totalorder %s28, 0
      %p177 = por %p175, %p176
      %p178 = scmp.ne.s32.totalorder %s166, %s167
      %p179 = scmp.eq.s32.totalorder %s29, 7
      %p180 = por %p178, %p179
      %p182 = scmp.ne.s32.totalorder %s167, %s181
      %p183 = scmp.eq.s32.totalorder %s29, 0
      %p184 = por %p182, %p183
      %s186 = sadd.s32 %s185, 1
      %p189 = scmp.eq.s32.totalorder %s23, 7
      %p190 = scmp.ne.s32.totalorder %s185, %s187
      %p191 = scmp.eq.s32.totalorder %s23, 0
      %p192 = por %p190, %p191
      %p193 = scmp.ne.s32.totalorder %s185, %s187
      %p194 = scmp.eq.s32.totalorder %s28, 7
      %p195 = por %p193, %p194
      %p196 = scmp.ne.s32.totalorder %s187, %s188
      %p197 = scmp.eq.s32.totalorder %s28, 0
      %p198 = por %p196, %p197
      %p199 = scmp.ne.s32.totalorder %s187, %s188
      %p200 = scmp.eq.s32.totalorder %s29, 7
      %p201 = por %p199, %p200
      %p203 = scmp.ne.s32.totalorder %s188, %s202
      %p204 = scmp.eq.s32.totalorder %s29, 0
      %p205 = por %p203, %p204
      %s207 = sadd.s32 %s206, 1
      %p210 = scmp.eq.s32.totalorder %s23, 7
      %p211 = scmp.ne.s32.totalorder %s206, %s208
      %p212 = scmp.eq.s32.totalorder %s23, 0
      %p213 = por %p211, %p212
      %p214 = scmp.ne.s32.totalorder %s206, %s208
      %p215 = scmp.eq.s32.totalorder %s28, 7
      %p216 = por %p214, %p215
      %p217 = scmp.ne.s32.totalorder %s208, %s209
      %p218 = scmp.eq.s32.totalorder %s28, 0
      %p219 = por %p217, %p218
      %p220 = scmp.ne.s32.totalorder %s208, %s209
      %p221 = scmp.eq.s32.totalorder %s29, 7
      %p222 = por %p220, %p221
      %p224 = scmp.ne.s32.totalorder %s209, %s223
      %p225 = scmp.eq.s32.totalorder %s29, 0
      %p226 = por %p224, %p225
      %s227 = ssub.s32 %s30, %s42
      %s228 = ssub.s32 %s31, %s38
      %s229 = sor.u32 %s227, %s228
      %p230 = scmp.eq.s32.totalorder %s229, 0
      %s232 = sadd.s32 %s231, 1
      %s233 = scalar_select %p230, %s231, %s232
      %p236 = pneg %p230
      %p237 = scmp.eq.s32.totalorder %s23, 7
      %p238 = por %p236, %p237
      %p239 = scmp.ne.s32.totalorder %s231, %s234
      %p240 = scmp.eq.s32.totalorder %s23, 0
      %p241 = por %p239, %p240
      %p242 = scmp.ne.s32.totalorder %s231, %s234
      %p243 = scmp.eq.s32.totalorder %s28, 7
      %p244 = por %p242, %p243
      %p245 = scmp.ne.s32.totalorder %s234, %s235
      %p246 = scmp.eq.s32.totalorder %s28, 0
      %p247 = por %p245, %p246
      %p248 = scmp.ne.s32.totalorder %s234, %s235
      %p249 = scmp.eq.s32.totalorder %s29, 7
      %p250 = por %p248, %p249
      %p252 = scmp.ne.s32.totalorder %s235, %s251
      %p253 = scmp.eq.s32.totalorder %s29, 0
      %p254 = por %p252, %p253
      %p255 = scmp.le.s32.totalorder 1, %s23
      %p256 = scmp.lt.s32.totalorder %s23, 9
      %p257 = pnand %p255, %p256
      %p258 = pneg %p257
      // Predicated region
      $region9: #{tpu_custom_call.1} parent=5 // pred_check
        _
      $region10: #{tpu_custom_call.1} parent=5 // pred_check_branch
        %260 = sbr.rel (%p257) target = $region12
      $region11: #{tpu_custom_call.1} parent=5 // pred_region
        %s261 = ssub.s32 %s23, 1
        // Predicated region
        $region13: #{tpu_custom_call.1} parent=11 // pred_check
          %p262 = pneg %p156
        $region14: #{tpu_custom_call.1} parent=11 // pred_check_branch
          %264 = sbr.rel (%p262) target = $region16
        $region15: #{tpu_custom_call.1} parent=11 // pred_region
          %s266 = ssub.s32 9216, 9216
          %267 = vsyncadd [#allocation10], %s266
          %s268 = sshll.u32 [#allocation9], 4
          %s269 = int_to_ptr.vmem [resolvable:$true] %s268
          %274 = dma.hbm_to_vmem [thread:$0]  %s3, 9216, %s269, [#allocation10], 64, 64, 4
        $region16: #{tpu_custom_call.1} parent=11 // pred_fallthru
          _
        // Predicated region
        $region17: #{tpu_custom_call.1} parent=11 // pred_check
          %p275 = pneg %p177
        $region18: #{tpu_custom_call.1} parent=11 // pred_check_branch
          %277 = sbr.rel (%p275) target = $region20
        $region19: #{tpu_custom_call.1} parent=11 // pred_region
          _
        $region20: #{tpu_custom_call.1} parent=11 // pred_fallthru
          _
        // Predicated region
        $region21: #{tpu_custom_call.1} parent=11 // pred_check
          %p278 = pneg %p198
        $region22: #{tpu_custom_call.1} parent=11 // pred_check_branch
          %280 = sbr.rel (%p278) target = $region24
        $region23: #{tpu_custom_call.1} parent=11 // pred_region
          %s282 = ssub.s32 1024, 1024
          %283 = vsyncadd [#allocation10], %s282
          %s284 = sshll.u32 [#allocation11], 4
          %s285 = int_to_ptr.vmem [resolvable:$true] %s284
          %290 = dma.hbm_to_vmem [thread:$0]  %s5, 1024, %s285, [#allocation10], 64, 64, 4
        $region24: #{tpu_custom_call.1} parent=11 // pred_fallthru
          _
        // Predicated region
        $region25: #{tpu_custom_call.1} parent=11 // pred_check
          %p291 = pneg %p219
        $region26: #{tpu_custom_call.1} parent=11 // pred_check_branch
          %293 = sbr.rel (%p291) target = $region28
        $region27: #{tpu_custom_call.1} parent=11 // pred_region
          _
        $region28: #{tpu_custom_call.1} parent=11 // pred_fallthru
          _
      $region12: #{tpu_custom_call.1} parent=5 // pred_fallthru
        _
      %p294 = scmp.lt.s32.totalorder %s23, 8
      // Predicated region
      $region29: #{tpu_custom_call.1} parent=5 // pred_check
        %p295 = pneg %p294
      $region30: #{tpu_custom_call.1} parent=5 // pred_check_branch
        %297 = sbr.rel (%p295) target = $region32
      $region31: #{tpu_custom_call.1} parent=5 // pred_region
        // Predicated region
        $region33: #{tpu_custom_call.1} parent=31 // pred_check
          %p298 = pneg %p57
        $region34: #{tpu_custom_call.1} parent=31 // pred_check_branch
          %300 = sbr.rel (%p298) target = $region36
        $region35: #{tpu_custom_call.1} parent=31 // pred_region
          %s301 = sand.u32 %s47, 1
          %s302 = scalar_lea.sflag [#allocation4], %s301
          %s303 = sand.u32 %s47, 1
          %s304 = smul.addr %s303, 32
          %s305 = scalar_lea.vmem [#allocation3], %s304
          %s306 = smul.u32 4, %s31
          %s308 = ssub.s32 512, 512
          %309 = vsyncadd %s302, %s308
          %s310 = smul.addr %s306, 2
          %s311 = smul.addr %s30, 32
          %s312 = sadd.s32 %s310, %s311
          %s313 = smul.addr %s312, 64
          %s314 = scalar_lea.hbm %s0, %s313
          %s315 = sshll.u32 %s305, 4
          %s316 = int_to_ptr.vmem [resolvable:$true] %s315
          %321 = dma.hbm_to_vmem [thread:$0]  %s314, 512, %s316, %s302, 64, 64, 4
        $region36: #{tpu_custom_call.1} parent=31 // pred_fallthru
          _
        // Predicated region
        $region37: #{tpu_custom_call.1} parent=31 // pred_check
          %p322 = pneg %p93
        $region38: #{tpu_custom_call.1} parent=31 // pred_check_branch
          %324 = sbr.rel (%p322) target = $region40
        $region39: #{tpu_custom_call.1} parent=31 // pred_region
          %s325 = sand.u32 %s23, 1
          %s326 = scalar_lea.sflag [#allocation7], %s325
          %s327 = sand.u32 %s83, 1
          %s328 = smul.addr %s327, 8
          %s329 = scalar_lea.vmem [#allocation6], %s328
          %s330 = smul.u32 %s31, 4
          %s331 = ssub.s32 %s330, 1
          %p332 = scmp.gt.s32.totalorder %s331, 0
          %s333 = scalar_select %p332, %s331, 0
          %s335 = ssub.s32 128, 128
          %336 = vsyncadd %s326, %s335
          %s337 = smul.addr %s333, 2
          %s338 = smul.addr %s30, 32
          %s339 = sadd.s32 %s337, %s338
          %s340 = smul.addr %s339, 64
          %s341 = scalar_lea.hbm %s1, %s340
          %s342 = sshll.u32 %s329, 4
          %s343 = int_to_ptr.vmem [resolvable:$true] %s342
          %348 = dma.hbm_to_vmem [thread:$0]  %s341, 128, %s343, %s326, 64, 64, 4
        $region40: #{tpu_custom_call.1} parent=31 // pred_fallthru
          _
        // Predicated region
        $region41: #{tpu_custom_call.1} parent=31 // pred_check
          %p349 = pneg %p129
        $region42: #{tpu_custom_call.1} parent=31 // pred_check_branch
          %351 = sbr.rel (%p349) target = $region44
        $region43: #{tpu_custom_call.1} parent=31 // pred_region
          %s352 = sand.u32 %s23, 1
          %s353 = scalar_lea.sflag [#allocation7], %s352
          %s354 = sand.u32 %s119, 1
          %s355 = smul.addr %s354, 8
          %s356 = scalar_lea.vmem [#allocation8], %s355
          %s357 = smul.u32 %s31, 4
          %s358 = sadd.s32 %s357, 4
          %p359 = scmp.lt.s32.totalorder %s358, 15
          %s360 = scalar_select %p359, %s358, 15
          %s362 = ssub.s32 128, 128
          %363 = vsyncadd %s353, %s362
          %s364 = smul.addr %s360, 2
          %s365 = smul.addr %s30, 32
          %s366 = sadd.s32 %s364, %s365
          %s367 = smul.addr %s366, 64
          %s368 = scalar_lea.hbm %s2, %s367
          %s369 = sshll.u32 %s356, 4
          %s370 = int_to_ptr.vmem [resolvable:$true] %s369
          %375 = dma.hbm_to_vmem [thread:$0]  %s368, 128, %s370, %s353, 64, 64, 4
        $region44: #{tpu_custom_call.1} parent=31 // pred_fallthru
          _
      $region32: #{tpu_custom_call.1} parent=5 // pred_fallthru
        _
      %p376 = scmp.le.s32.totalorder 1, %s23
      %p377 = scmp.lt.s32.totalorder %s23, 9
      %p378 = pnand %p376, %p377
      %p379 = pneg %p378
      // Predicated region
      $region45: #{tpu_custom_call.1} parent=5 // pred_check
        _
      $region46: #{tpu_custom_call.1} parent=5 // pred_check_branch
        %381 = sbr.rel (%p378) target = $region48
      $region47: #{tpu_custom_call.1} parent=5 // pred_region
        %s382 = ssub.s32 %s23, 1
        %s383 = sand.u32 %s50, 1
        %s384 = scalar_lea.sflag [#allocation4], %s383
        %s385 = sand.u32 %s50, 1
        %s386 = smul.addr %s385, 32
        %s387 = scalar_lea.vmem [#allocation3], %s386
        // Predicated region
        $region49: #{tpu_custom_call.1} parent=47 // pred_check
          %p388 = pneg %p63
        $region50: #{tpu_custom_call.1} parent=47 // pred_check_branch
          %390 = sbr.rel (%p388) target = $region52
        $region51: #{tpu_custom_call.1} parent=47 // pred_region
          %391 = dma.done %s384, 512
        $region52: #{tpu_custom_call.1} parent=47 // pred_fallthru
          _
        %s392 = sand.u32 %s28, 1
        %s393 = scalar_lea.sflag [#allocation7], %s392
        %s394 = sand.u32 %s86, 1
        %s395 = smul.addr %s394, 8
        %s396 = scalar_lea.vmem [#allocation6], %s395
        // Predicated region
        $region53: #{tpu_custom_call.1} parent=47 // pred_check
          %p397 = pneg %p99
        $region54: #{tpu_custom_call.1} parent=47 // pred_check_branch
          %399 = sbr.rel (%p397) target = $region56
        $region55: #{tpu_custom_call.1} parent=47 // pred_region
          %400 = dma.done %s393, 128
        $region56: #{tpu_custom_call.1} parent=47 // pred_fallthru
          _
        %s401 = sand.u32 %s28, 1
        %s402 = scalar_lea.sflag [#allocation7], %s401
        %s403 = sand.u32 %s122, 1
        %s404 = smul.addr %s403, 8
        %s405 = scalar_lea.vmem [#allocation8], %s404
        // Predicated region
        $region57: #{tpu_custom_call.1} parent=47 // pred_check
          %p406 = pneg %p135
        $region58: #{tpu_custom_call.1} parent=47 // pred_check_branch
          %408 = sbr.rel (%p406) target = $region60
        $region59: #{tpu_custom_call.1} parent=47 // pred_region
          %409 = dma.done %s402, 128
        $region60: #{tpu_custom_call.1} parent=47 // pred_fallthru
          _
        // Predicated region
        $region61: #{tpu_custom_call.1} parent=47 // pred_check
          %p410 = pneg %p156
        $region62: #{tpu_custom_call.1} parent=47 // pred_check_branch
          %412 = sbr.rel (%p410) target = $region64
        $region63: #{tpu_custom_call.1} parent=47 // pred_region
          %413 = dma.done [#allocation10], 9216
        $region64: #{tpu_custom_call.1} parent=47 // pred_fallthru
          _
        // Predicated region
        $region65: #{tpu_custom_call.1} parent=47 // pred_check
          %p414 = pneg %p198
        $region66: #{tpu_custom_call.1} parent=47 // pred_check_branch
          %416 = sbr.rel (%p414) target = $region68
        $region67: #{tpu_custom_call.1} parent=47 // pred_region
          %417 = dma.done [#allocation10], 1024
        $region68: #{tpu_custom_call.1} parent=47 // pred_fallthru
          _
        %s418 = sand.u32 %s50, 1
        %s419 = scalar_lea.sflag [#allocation4], %s418
        %s420 = sand.u32 %s50, 1
        %s421 = smul.addr %s420, 32
        %s422 = scalar_lea.vmem [#allocation3], %s421
        %p423 = pneg %p63
        %p424 = pneg %p60
        %s425 = sand.u32 %s28, 1
        %s426 = scalar_lea.sflag [#allocation7], %s425
        %s427 = sand.u32 %s86, 1
        %s428 = smul.addr %s427, 8
        %s429 = scalar_lea.vmem [#allocation6], %s428
        %p430 = pneg %p99
        %p431 = pneg %p96
        %s432 = sand.u32 %s28, 1
        %s433 = scalar_lea.sflag [#allocation7], %s432
        %s434 = sand.u32 %s122, 1
        %s435 = smul.addr %s434, 8
        %s436 = scalar_lea.vmem [#allocation8], %s435
        %p437 = pneg %p135
        %p438 = pneg %p132
        %p439 = pneg %p156
        %p440 = pneg %p153
        %p441 = pneg %p177
        %p442 = pneg %p174
        %p443 = pneg %p198
        %p444 = pneg %p195
        %p445 = pneg %p219
        %p446 = pneg %p216
        %p447 = pneg %p247
        %p448 = pneg %p244
        %s449 = sand.u32 %s234, 1
        %s450 = scalar_lea.sflag [#allocation5], %s449
        %s451 = sand.u32 %s234, 1
        %s452 = smul.addr %s451, 64
        %s453 = scalar_lea.vmem [#allocation12], %s452
        %s454 = smul.u32 4, %s33
        %s455 = smul.u32 %s33, 4
        %s456 = ssub.s32 %s455, 1
        %p457 = scmp.gt.s32.totalorder %s456, 0
        %s458 = scalar_select %p457, %s456, 0
        %s459 = smul.u32 %s33, 4
        %s460 = sadd.s32 %s459, 4
        %p461 = scmp.lt.s32.totalorder %s460, 15
        %s462 = scalar_select %p461, %s460, 15
        %s463 = smul.u32 4, %s33
        %v465 = vld [vmem:[%s387] sm:$0xf]
        %v466 = vld [vmem:[%s387 + $0x4] sm:$0xf]
        %v467 = vld [vmem:[%s387 + $0x8] sm:$0xf]
        %v468 = vld [vmem:[%s387 + $0xc] sm:$0xf]
        %v469 = vld [vmem:[%s387 + $0x10] sm:$0xf]
        %v470 = vld [vmem:[%s387 + $0x14] sm:$0xf]
        %v471 = vld [vmem:[%s387 + $0x18] sm:$0xf]
        %v472 = vld [vmem:[%s387 + $0x1c] sm:$0xf]
        %p473 = scmp.gt.s32.totalorder %s33, 0
        %s474 = scalar_select %p473, 1, 0
        %s475 = scvt.s32.f32 %s474
        %p477 = scmp.ne.f32.partialorder %s475, %s475
        %s478 = sshrl.u32 %s475, 16
        %s479 = sand.u32 %s478, 1
        %s480 = sadd.s32 32767, %s479
        %s481 = sadd.s32 %s475, %s480
        %s482 = sand.u32 %s481, 4294901760
        %s483 = scalar_select %p477, 2143289344, %s482
        %s485 = sshrl.u32 %s483, 16
        %p486 = scmp.lt.s32.totalorder %s33, 3
        %s487 = scalar_select %p486, 1, 0
        %s488 = scvt.s32.f32 %s487
        %p490 = scmp.ne.f32.partialorder %s488, %s488
        %s491 = sshrl.u32 %s488, 16
        %s492 = sand.u32 %s491, 1
        %s493 = sadd.s32 32767, %s492
        %s494 = sadd.s32 %s488, %s493
        %s495 = sand.u32 %s494, 4294901760
        %s496 = scalar_select %p490, 2143289344, %s495
        %s498 = sshrl.u32 %s496, 16
        %v499 = vld [vmem:[%s396] sm:$0xf]
        %v500 = vld [vmem:[%s396 + $0x4] sm:$0xf]
        %v501 = vmax.bf16 %v499, 0
        %v502 = vmax.bf16 %v500, 0
        %s503 = sshll.u32 %s485, 16
        %s504 = sor.u32 %s485, %s503
        %v505 = vstv %s504
        %v507 = vmul.bf16 %v501, %v505
        %v508 = vmul.bf16 %v502, %v505
        %v509 = vld [vmem:[%s405] sm:$0xf]
        %v510 = vld [vmem:[%s405 + $0x4] sm:$0xf]
        %v511 = vmax.bf16 %v509, 0
        %v512 = vmax.bf16 %v510, 0
        %s513 = sshll.u32 %s498, 16
        %s514 = sor.u32 %s498, %s513
        %v515 = vstv %s514
        %v517 = vmul.bf16 %v511, %v515
        %v518 = vmul.bf16 %v512, %v515
        %vm519 = vcmask 1040384
        %vm520 = vsmask.f32 256
        %vm521 = vmand %vm519, %vm520
        %v522 = vld [vmem:[#allocation2] sm:$0x1]
        %v523 = vsel %vm521, 0, %v522
        %524 = vst [vmem:[#allocation2] sm:$0x1] %v523
        %v525 = vld [vmem:[#allocation2 + $0xc] sm:$0x1]
        %v526 = vsel %vm521, 0, %v525
        %527 = vst [vmem:[#allocation2 + $0xc] sm:$0x1] %v526
        %v528 = vld [vmem:[#allocation2 + $0x18] sm:$0x1]
        %v529 = vsel %vm521, 0, %v528
        %530 = vst [vmem:[#allocation2 + $0x18] sm:$0x1] %v529
        %v531 = vld [vmem:[#allocation2 + $0x24] sm:$0x1]
        %v532 = vsel %vm521, 0, %v531
        %533 = vst [vmem:[#allocation2 + $0x24] sm:$0x1] %v532
        %v534 = vld [vmem:[#allocation2 + $0x30] sm:$0x1]
        %v535 = vsel %vm521, 0, %v534
        %536 = vst [vmem:[#allocation2 + $0x30] sm:$0x1] %v535
        %v537 = vld [vmem:[#allocation2 + $0x3c] sm:$0x1]
        %v538 = vsel %vm521, 0, %v537
        %539 = vst [vmem:[#allocation2 + $0x3c] sm:$0x1] %v538
        %vm540 = vsmask.f32 7938
        %vm541 = vmand %vm519, %vm540
        %v542 = vld [vmem:[#allocation2 + $0x8] sm:$0x1]
        %v543 = vsel %vm541, 0, %v542
        %544 = vst [vmem:[#allocation2 + $0x8] sm:$0x1] %v543
        %v545 = vld [vmem:[#allocation2 + $0x14] sm:$0x1]
        %v546 = vsel %vm541, 0, %v545
        %547 = vst [vmem:[#allocation2 + $0x14] sm:$0x1] %v546
        %v548 = vld [vmem:[#allocation2 + $0x20] sm:$0x1]
        %v549 = vsel %vm541, 0, %v548
        %550 = vst [vmem:[#allocation2 + $0x20] sm:$0x1] %v549
        %v551 = vld [vmem:[#allocation2 + $0x2c] sm:$0x1]
        %v552 = vsel %vm541, 0, %v551
        %553 = vst [vmem:[#allocation2 + $0x2c] sm:$0x1] %v552
        %v554 = vld [vmem:[#allocation2 + $0x38] sm:$0x1]
        %v555 = vsel %vm541, 0, %v554
        %556 = vst [vmem:[#allocation2 + $0x38] sm:$0x1] %v555
        %v557 = vld [vmem:[#allocation2 + $0x44] sm:$0x1]
        %v558 = vsel %vm541, 0, %v557
        %559 = vst [vmem:[#allocation2 + $0x44] sm:$0x1] %v558
        %vm560 = vsmask.f32 4368
        %vm561 = vmor %vm520, %vm560
        %v563 = vshrl.u32 %v507, 16
        %v565 = vrot.slane %v563, 7
        %v566 = vshll.u32 %v507, 16
        %v568 = vor.u32 %v565, %v566
        %v569 = vrot.slane %v565, 4
        %v571 = vshrl.u32 %v508, 16
        %v573 = vrot.slane %v571, 7
        %v574 = vshll.u32 %v508, 16
        %v576 = vor.u32 %v573, %v574
        %v577 = vsel %vm561, %v569, %v576
        %v578 = vrot.slane %v573, 4
        %vm582 = vcmask 1043456
        %vm583 = vmand %vm582, %vm540
        %v584 = vld [vmem:[#allocation2] sm:$0xf]
        %v585 = vsel %vm583, %v568, %v584
        %586 = vst [vmem:[#allocation2] sm:$0xf] %v585
        %587 = vst [vmem:[#allocation2 + $0x4] sm:$0xf] %v577
        %v588 = vld [vmem:[#allocation2 + $0x8] sm:$0x1]
        %v589 = vsel %vm521, %v578, %v588
        %590 = vst [vmem:[#allocation2 + $0x8] sm:$0x1] %v589
        %v591 = vmax.bf16 %v465, 0
        %v592 = vmax.bf16 %v466, 0
        %v593 = vmax.bf16 %v467, 0
        %v594 = vmax.bf16 %v468, 0
        %v595 = vmax.bf16 %v469, 0
        %v596 = vmax.bf16 %v470, 0
        %v597 = vmax.bf16 %v471, 0
        %v598 = vmax.bf16 %v472, 0
        %v600 = vshrl.u32 %v591, 16
        %v602 = vrot.slane %v600, 7
        %v603 = vshll.u32 %v591, 16
        %v605 = vor.u32 %v602, %v603
        %v606 = vrot.slane %v602, 4
        %v608 = vshrl.u32 %v592, 16
        %v610 = vrot.slane %v608, 7
        %v611 = vshll.u32 %v592, 16
        %v613 = vor.u32 %v610, %v611
        %v614 = vsel %vm561, %v606, %v613
        %v615 = vrot.slane %v610, 4
        %v617 = vshrl.u32 %v593, 16
        %v619 = vrot.slane %v617, 7
        %v620 = vshll.u32 %v593, 16
        %v622 = vor.u32 %v619, %v620
        %v623 = vrot.slane %v619, 4
        %v625 = vshrl.u32 %v594, 16
        %v627 = vrot.slane %v625, 7
        %v628 = vshll.u32 %v594, 16
        %v630 = vor.u32 %v627, %v628
        %v631 = vsel %vm561, %v623, %v630
        %v632 = vrot.slane %v627, 4
        %v634 = vshrl.u32 %v595, 16
        %v636 = vrot.slane %v634, 7
        %v637 = vshll.u32 %v595, 16
        %v639 = vor.u32 %v636, %v637
        %v640 = vrot.slane %v636, 4
        %v642 = vshrl.u32 %v596, 16
        %v644 = vrot.slane %v642, 7
        %v645 = vshll.u32 %v596, 16
        %v647 = vor.u32 %v644, %v645
        %v648 = vsel %vm561, %v640, %v647
        %v649 = vrot.slane %v644, 4
        %v651 = vshrl.u32 %v597, 16
        %v653 = vrot.slane %v651, 7
        %v654 = vshll.u32 %v597, 16
        %v656 = vor.u32 %v653, %v654
        %v657 = vrot.slane %v653, 4
        %v659 = vshrl.u32 %v598, 16
        %v661 = vrot.slane %v659, 7
        %v662 = vshll.u32 %v598, 16
        %v664 = vor.u32 %v661, %v662
        %v665 = vsel %vm561, %v657, %v664
        %v666 = vrot.slane %v661, 4
        %s679 = scalar_lea.vmem [#allocation2], 12
        %v680 = vld [vmem:[%s679] sm:$0xf]
        %v681 = vsel %vm583, %v605, %v680
        %682 = vst [vmem:[%s679] sm:$0xf] %v681
        %683 = vst [vmem:[%s679 + $0x4] sm:$0xf] %v614
        %v684 = vld [vmem:[%s679 + $0x8] sm:$0x1]
        %v685 = vsel %vm521, %v615, %v684
        %686 = vst [vmem:[%s679 + $0x8] sm:$0x1] %v685
        %v687 = vld [vmem:[%s679 + $0xc] sm:$0xf]
        %v688 = vsel %vm583, %v622, %v687
        %689 = vst [vmem:[%s679 + $0xc] sm:$0xf] %v688
        %690 = vst [vmem:[%s679 + $0x10] sm:$0xf] %v631
        %v691 = vld [vmem:[%s679 + $0x14] sm:$0x1]
        %v692 = vsel %vm521, %v632, %v691
        %693 = vst [vmem:[%s679 + $0x14] sm:$0x1] %v692
        %v694 = vld [vmem:[%s679 + $0x18] sm:$0xf]
        %v695 = vsel %vm583, %v639, %v694
        %696 = vst [vmem:[%s679 + $0x18] sm:$0xf] %v695
        %697 = vst [vmem:[%s679 + $0x1c] sm:$0xf] %v648
        %v698 = vld [vmem:[%s679 + $0x20] sm:$0x1]
        %v699 = vsel %vm521, %v649, %v698
        %700 = vst [vmem:[%s679 + $0x20] sm:$0x1] %v699
        %v701 = vld [vmem:[%s679 + $0x24] sm:$0xf]
        %v702 = vsel %vm583, %v656, %v701
        %703 = vst [vmem:[%s679 + $0x24] sm:$0xf] %v702
        %704 = vst [vmem:[%s679 + $0x28] sm:$0xf] %v665
        %v705 = vld [vmem:[%s679 + $0x2c] sm:$0x1]
        %v706 = vsel %vm521, %v666, %v705
        %707 = vst [vmem:[%s679 + $0x2c] sm:$0x1] %v706
        %v709 = vshrl.u32 %v517, 16
        %v711 = vrot.slane %v709, 7
        %v712 = vshll.u32 %v517, 16
        %v714 = vor.u32 %v711, %v712
        %v715 = vrot.slane %v711, 4
        %v717 = vshrl.u32 %v518, 16
        %v719 = vrot.slane %v717, 7
        %v720 = vshll.u32 %v518, 16
        %v722 = vor.u32 %v719, %v720
        %v723 = vsel %vm561, %v715, %v722
        %v724 = vrot.slane %v719, 4
        %s728 = scalar_lea.vmem [#allocation2], 60
        %v729 = vld [vmem:[%s728] sm:$0xf]
        %v730 = vsel %vm583, %v714, %v729
        %731 = vst [vmem:[%s728] sm:$0xf] %v730
        %732 = vst [vmem:[%s728 + $0x4] sm:$0xf] %v723
        %v733 = vld [vmem:[%s728 + $0x8] sm:$0x1]
        %v734 = vsel %vm521, %v724, %v733
        %735 = vst [vmem:[%s728 + $0x8] sm:$0x1] %v734
        %v736 = vld [vmem:[#allocation2] sm:$0xf]
        %v737 = vld [vmem:[#allocation2 + $0x4] sm:$0xf]
        %v738 = vld [vmem:[#allocation2 + $0xc] sm:$0xf]
        %v739 = vld [vmem:[#allocation2 + $0x10] sm:$0xf]
        %v740 = vld [vmem:[#allocation2 + $0x18] sm:$0xf]
        %v741 = vld [vmem:[#allocation2 + $0x1c] sm:$0xf]
        %v742 = vld [vmem:[#allocation2 + $0x24] sm:$0xf]
        %v743 = vld [vmem:[#allocation2 + $0x28] sm:$0xf]
        %v744 = vld [vmem:[#allocation2 + $0x30] sm:$0xf]
        %v745 = vld [vmem:[#allocation2 + $0x34] sm:$0xf]
        %v746 = vld [vmem:[#allocation2 + $0x3c] sm:$0xf]
        %v747 = vld [vmem:[#allocation2 + $0x40] sm:$0xf]
        %v748 = vld [vmem:[#allocation2] sm:$0xf]
        %v749 = vld [vmem:[#allocation2 + $0x4] sm:$0xf]
        %v750 = vld [vmem:[#allocation2 + $0x8] sm:$0x1]
        %v751 = vld [vmem:[#allocation2 + $0xc] sm:$0xf]
        %v752 = vld [vmem:[#allocation2 + $0x10] sm:$0xf]
        %v753 = vld [vmem:[#allocation2 + $0x14] sm:$0x1]
        %v754 = vld [vmem:[#allocation2 + $0x18] sm:$0xf]
        %v755 = vld [vmem:[#allocation2 + $0x1c] sm:$0xf]
        %v756 = vld [vmem:[#allocation2 + $0x20] sm:$0x1]
        %v757 = vld [vmem:[#allocation2 + $0x24] sm:$0xf]
        %v758 = vld [vmem:[#allocation2 + $0x28] sm:$0xf]
        %v759 = vld [vmem:[#allocation2 + $0x2c] sm:$0x1]
        %v760 = vld [vmem:[#allocation2 + $0x30] sm:$0xf]
        %v761 = vld [vmem:[#allocation2 + $0x34] sm:$0xf]
        %v762 = vld [vmem:[#allocation2 + $0x38] sm:$0x1]
        %v763 = vld [vmem:[#allocation2 + $0x3c] sm:$0xf]
        %v764 = vld [vmem:[#allocation2 + $0x40] sm:$0xf]
        %v765 = vld [vmem:[#allocation2 + $0x44] sm:$0x1]
        %v766 = vld [vmem:[#allocation2] sm:$0xe]
        %v767 = vld [vmem:[#allocation2 + $0xc] sm:$0xe]
        %v768 = vld [vmem:[#allocation2 + $0x18] sm:$0xe]
        %v769 = vld [vmem:[#allocation2 + $0x24] sm:$0xe]
        %v770 = vld [vmem:[#allocation2 + $0x30] sm:$0xe]
        %v771 = vld [vmem:[#allocation2 + $0x3c] sm:$0xe]
        %v784 = vunpack.c.l.b16 %v736
        %v785 = vunpack.c.l.b16 %v737
        %v786 = vunpack.c.l.b16 %v738
        %v787 = vunpack.c.l.b16 %v739
        %v788 = vunpack.c.l.b16 %v740
        %v789 = vunpack.c.l.b16 %v741
        %v790 = vunpack.c.l.b16 %v742
        %v791 = vunpack.c.l.b16 %v743
        %v792 = vunpack.c.l.b16 %v744
        %v793 = vunpack.c.l.b16 %v745
        %v794 = vunpack.c.l.b16 %v746
        %v795 = vunpack.c.l.b16 %v747
        %v796 = vpack.c.b16 %v785, %v784
        %v797 = vpack.c.b16 %v787, %v786
        %v798 = vpack.c.b16 %v789, %v788
        %v799 = vpack.c.b16 %v791, %v790
        %v800 = vpack.c.b16 %v793, %v792
        %v801 = vpack.c.b16 %v795, %v794
        %v826 = vunpack.c.l.b16 %v748
        %v827 = vunpack.c.l.b16 %v749
        %v828 = vunpack.c.l.b16 %v750
        %v829 = vunpack.c.l.b16 %v751
        %v830 = vunpack.c.l.b16 %v752
        %v831 = vunpack.c.l.b16 %v753
        %v832 = vunpack.c.l.b16 %v754
        %v833 = vunpack.c.l.b16 %v755
        %v834 = vunpack.c.l.b16 %v756
        %v835 = vunpack.c.l.b16 %v757
        %v836 = vunpack.c.l.b16 %v758
        %v837 = vunpack.c.l.b16 %v759
        %v838 = vunpack.c.l.b16 %v760
        %v839 = vunpack.c.l.b16 %v761
        %v840 = vunpack.c.l.b16 %v762
        %v841 = vunpack.c.l.b16 %v763
        %v842 = vunpack.c.l.b16 %v764
        %v843 = vunpack.c.l.b16 %v765
        %v844 = vpack.c.b16 %v827, %v826
        %v845 = vpack.c.b16 %v828, %v828
        %v846 = vpack.c.b16 %v830, %v829
        %v847 = vpack.c.b16 %v831, %v831
        %v848 = vpack.c.b16 %v833, %v832
        %v849 = vpack.c.b16 %v834, %v834
        %v850 = vpack.c.b16 %v836, %v835
        %v851 = vpack.c.b16 %v837, %v837
        %v852 = vpack.c.b16 %v839, %v838
        %v853 = vpack.c.b16 %v840, %v840
        %v854 = vpack.c.b16 %v842, %v841
        %v855 = vpack.c.b16 %v843, %v843
        %vm856 = vsmask.f32 7424
        %v858 = vshrl.u32 %v844, 16
        %v860 = vshll.u32 %v844, 16
        %v862 = vrot.slane %v860, 1
        %v863 = vor.u32 %v858, %v862
        %v865 = vshll.u32 %v845, 16
        %v867 = vrot.slane %v865, 1
        %v868 = vsel %vm856, %v863, %v867
        %v870 = vshrl.u32 %v846, 16
        %v872 = vshll.u32 %v846, 16
        %v874 = vrot.slane %v872, 1
        %v875 = vor.u32 %v870, %v874
        %v877 = vshll.u32 %v847, 16
        %v879 = vrot.slane %v877, 1
        %v880 = vsel %vm856, %v875, %v879
        %v882 = vshrl.u32 %v848, 16
        %v884 = vshll.u32 %v848, 16
        %v886 = vrot.slane %v884, 1
        %v887 = vor.u32 %v882, %v886
        %v889 = vshll.u32 %v849, 16
        %v891 = vrot.slane %v889, 1
        %v892 = vsel %vm856, %v887, %v891
        %v894 = vshrl.u32 %v850, 16
        %v896 = vshll.u32 %v850, 16
        %v898 = vrot.slane %v896, 1
        %v899 = vor.u32 %v894, %v898
        %v901 = vshll.u32 %v851, 16
        %v903 = vrot.slane %v901, 1
        %v904 = vsel %vm856, %v899, %v903
        %v906 = vshrl.u32 %v852, 16
        %v908 = vshll.u32 %v852, 16
        %v910 = vrot.slane %v908, 1
        %v911 = vor.u32 %v906, %v910
        %v913 = vshll.u32 %v853, 16
        %v915 = vrot.slane %v913, 1
        %v916 = vsel %vm856, %v911, %v915
        %v918 = vshrl.u32 %v854, 16
        %v920 = vshll.u32 %v854, 16
        %v922 = vrot.slane %v920, 1
        %v923 = vor.u32 %v918, %v922
        %v925 = vshll.u32 %v855, 16
        %v927 = vrot.slane %v925, 1
        %v928 = vsel %vm856, %v923, %v927
        %v941 = vunpack.c.l.b16 %v766
        %v942 = vunpack.c.l.b16 %v767
        %v943 = vunpack.c.l.b16 %v768
        %v944 = vunpack.c.l.b16 %v769
        %v945 = vunpack.c.l.b16 %v770
        %v946 = vunpack.c.l.b16 %v771
        %v947 = vpack.c.b16 %v827, %v941
        %v948 = vpack.c.b16 %v830, %v942
        %v949 = vpack.c.b16 %v833, %v943
        %v950 = vpack.c.b16 %v836, %v944
        %v951 = vpack.c.b16 %v839, %v945
        %v952 = vpack.c.b16 %v842, %v946
        %vm953 = vcmask 1046528
        %v954 = vrot.slane %v947, 1
        %v955 = vrot.slane %v845, 1
        %v956 = vsel %vm953, %v954, %v955
        %v957 = vrot.slane %v948, 1
        %v958 = vrot.slane %v847, 1
        %v959 = vsel %vm953, %v957, %v958
        %v960 = vrot.slane %v949, 1
        %v961 = vrot.slane %v849, 1
        %v962 = vsel %vm953, %v960, %v961
        %v963 = vrot.slane %v950, 1
        %v964 = vrot.slane %v851, 1
        %v965 = vsel %vm953, %v963, %v964
        %v966 = vrot.slane %v951, 1
        %v967 = vrot.slane %v853, 1
        %v968 = vsel %vm953, %v966, %v967
        %v969 = vrot.slane %v952, 1
        %v970 = vrot.slane %v855, 1
        %v971 = vsel %vm953, %v969, %v970
        %v978 = vld [vmem:[#allocation9] sm:$0xf]
        %v979 = vld [vmem:[#allocation9 + $0x4] sm:$0xf]
        %v980 = vld [vmem:[#allocation9 + $0x8] sm:$0xf]
        %v981 = vld [vmem:[#allocation9 + $0xc] sm:$0xf]
        %v982 = vld [vmem:[#allocation9 + $0x10] sm:$0xf]
        %v983 = vld [vmem:[#allocation9 + $0x14] sm:$0xf]
        %v984 = vld [vmem:[#allocation9 + $0x18] sm:$0xf]
        %v985 = vld [vmem:[#allocation9 + $0x1c] sm:$0xf]
        %v986 = vld [vmem:[#allocation9 + $0x20] sm:$0xf]
        %v987 = vld [vmem:[#allocation9 + $0x24] sm:$0xf]
        %v988 = vld [vmem:[#allocation9 + $0x28] sm:$0xf]
        %v989 = vld [vmem:[#allocation9 + $0x2c] sm:$0xf]
        %v990 = vld [vmem:[#allocation9 + $0x30] sm:$0xf]
        %v991 = vld [vmem:[#allocation9 + $0x34] sm:$0xf]
        %v992 = vld [vmem:[#allocation9 + $0x38] sm:$0xf]
        %v993 = vld [vmem:[#allocation9 + $0x3c] sm:$0xf]
        %v994 = vld [vmem:[#allocation9 + $0x40] sm:$0xf]
        %v995 = vld [vmem:[#allocation9 + $0x44] sm:$0xf]
        %v996 = vld [vmem:[#allocation9 + $0x48] sm:$0xf]
        %v997 = vld [vmem:[#allocation9 + $0x4c] sm:$0xf]
        %v998 = vld [vmem:[#allocation9 + $0x50] sm:$0xf]
        %v999 = vld [vmem:[#allocation9 + $0x54] sm:$0xf]
        %v1000 = vld [vmem:[#allocation9 + $0x58] sm:$0xf]
        %v1001 = vld [vmem:[#allocation9 + $0x5c] sm:$0xf]
        %v1002 = vld [vmem:[#allocation9 + $0x60] sm:$0xf]
        %v1003 = vld [vmem:[#allocation9 + $0x64] sm:$0xf]
        %v1004 = vld [vmem:[#allocation9 + $0x68] sm:$0xf]
        %v1005 = vld [vmem:[#allocation9 + $0x6c] sm:$0xf]
        %v1006 = vld [vmem:[#allocation9 + $0x70] sm:$0xf]
        %v1007 = vld [vmem:[#allocation9 + $0x74] sm:$0xf]
        %v1008 = vld [vmem:[#allocation9 + $0x78] sm:$0xf]
        %v1009 = vld [vmem:[#allocation9 + $0x7c] sm:$0xf]
        %v1010 = vld [vmem:[#allocation9 + $0x80] sm:$0xf]
        %v1011 = vld [vmem:[#allocation9 + $0x84] sm:$0xf]
        %v1012 = vld [vmem:[#allocation9 + $0x88] sm:$0xf]
        %v1013 = vld [vmem:[#allocation9 + $0x8c] sm:$0xf]
        %v1014 = vld [vmem:[#allocation9 + $0x90] sm:$0xf]
        %v1015 = vld [vmem:[#allocation9 + $0x94] sm:$0xf]
        %v1016 = vld [vmem:[#allocation9 + $0x98] sm:$0xf]
        %v1017 = vld [vmem:[#allocation9 + $0x9c] sm:$0xf]
        %v1018 = vld [vmem:[#allocation9 + $0xa0] sm:$0xf]
        %v1019 = vld [vmem:[#allocation9 + $0xa4] sm:$0xf]
        %v1020 = vld [vmem:[#allocation9 + $0xa8] sm:$0xf]
        %v1021 = vld [vmem:[#allocation9 + $0xac] sm:$0xf]
        %v1022 = vld [vmem:[#allocation9 + $0xb0] sm:$0xf]
        %v1023 = vld [vmem:[#allocation9 + $0xb4] sm:$0xf]
        %v1024 = vld [vmem:[#allocation9 + $0xb8] sm:$0xf]
        %v1025 = vld [vmem:[#allocation9 + $0xbc] sm:$0xf]
        %s1026 = scalar_lea.vmem [#allocation9], 192
        %v1027 = vld [vmem:[%s1026] sm:$0xf]
        %v1028 = vld [vmem:[%s1026 + $0x4] sm:$0xf]
        %v1029 = vld [vmem:[%s1026 + $0x8] sm:$0xf]
        %v1030 = vld [vmem:[%s1026 + $0xc] sm:$0xf]
        %v1031 = vld [vmem:[%s1026 + $0x10] sm:$0xf]
        %v1032 = vld [vmem:[%s1026 + $0x14] sm:$0xf]
        %v1033 = vld [vmem:[%s1026 + $0x18] sm:$0xf]
        %v1034 = vld [vmem:[%s1026 + $0x1c] sm:$0xf]
        %v1035 = vld [vmem:[%s1026 + $0x20] sm:$0xf]
        %v1036 = vld [vmem:[%s1026 + $0x24] sm:$0xf]
        %v1037 = vld [vmem:[%s1026 + $0x28] sm:$0xf]
        %v1038 = vld [vmem:[%s1026 + $0x2c] sm:$0xf]
        %v1039 = vld [vmem:[%s1026 + $0x30] sm:$0xf]
        %v1040 = vld [vmem:[%s1026 + $0x34] sm:$0xf]
        %v1041 = vld [vmem:[%s1026 + $0x38] sm:$0xf]
        %v1042 = vld [vmem:[%s1026 + $0x3c] sm:$0xf]
        %v1043 = vld [vmem:[%s1026 + $0x40] sm:$0xf]
        %v1044 = vld [vmem:[%s1026 + $0x44] sm:$0xf]
        %v1045 = vld [vmem:[%s1026 + $0x48] sm:$0xf]
        %v1046 = vld [vmem:[%s1026 + $0x4c] sm:$0xf]
        %v1047 = vld [vmem:[%s1026 + $0x50] sm:$0xf]
        %v1048 = vld [vmem:[%s1026 + $0x54] sm:$0xf]
        %v1049 = vld [vmem:[%s1026 + $0x58] sm:$0xf]
        %v1050 = vld [vmem:[%s1026 + $0x5c] sm:$0xf]
        %v1051 = vld [vmem:[%s1026 + $0x60] sm:$0xf]
        %v1052 = vld [vmem:[%s1026 + $0x64] sm:$0xf]
        %v1053 = vld [vmem:[%s1026 + $0x68] sm:$0xf]
        %v1054 = vld [vmem:[%s1026 + $0x6c] sm:$0xf]
        %v1055 = vld [vmem:[%s1026 + $0x70] sm:$0xf]
        %v1056 = vld [vmem:[%s1026 + $0x74] sm:$0xf]
        %v1057 = vld [vmem:[%s1026 + $0x78] sm:$0xf]
        %v1058 = vld [vmem:[%s1026 + $0x7c] sm:$0xf]
        %v1059 = vld [vmem:[%s1026 + $0x80] sm:$0xf]
        %v1060 = vld [vmem:[%s1026 + $0x84] sm:$0xf]
        %v1061 = vld [vmem:[%s1026 + $0x88] sm:$0xf]
        %v1062 = vld [vmem:[%s1026 + $0x8c] sm:$0xf]
        %v1063 = vld [vmem:[%s1026 + $0x90] sm:$0xf]
        %v1064 = vld [vmem:[%s1026 + $0x94] sm:$0xf]
        %v1065 = vld [vmem:[%s1026 + $0x98] sm:$0xf]
        %v1066 = vld [vmem:[%s1026 + $0x9c] sm:$0xf]
        %v1067 = vld [vmem:[%s1026 + $0xa0] sm:$0xf]
        %v1068 = vld [vmem:[%s1026 + $0xa4] sm:$0xf]
        %v1069 = vld [vmem:[%s1026 + $0xa8] sm:$0xf]
        %v1070 = vld [vmem:[%s1026 + $0xac] sm:$0xf]
        %v1071 = vld [vmem:[%s1026 + $0xb0] sm:$0xf]
        %v1072 = vld [vmem:[%s1026 + $0xb4] sm:$0xf]
        %v1073 = vld [vmem:[%s1026 + $0xb8] sm:$0xf]
        %v1074 = vld [vmem:[%s1026 + $0xbc] sm:$0xf]
        %v1123 = vunpack.c.l.b16 %v1027
        %v1124 = vunpack.c.l.b16 %v1028
        %v1125 = vunpack.c.l.b16 %v1029
        %v1126 = vunpack.c.l.b16 %v1030
        %v1127 = vunpack.c.l.b16 %v1031
        %v1128 = vunpack.c.l.b16 %v1032
        %v1129 = vunpack.c.l.b16 %v1033
        %v1130 = vunpack.c.l.b16 %v1034
        %v1131 = vunpack.c.l.b16 %v1035
        %v1132 = vunpack.c.l.b16 %v1036
        %v1133 = vunpack.c.l.b16 %v1037
        %v1134 = vunpack.c.l.b16 %v1038
        %v1135 = vunpack.c.l.b16 %v1039
        %v1136 = vunpack.c.l.b16 %v1040
        %v1137 = vunpack.c.l.b16 %v1041
        %v1138 = vunpack.c.l.b16 %v1042
        %v1139 = vunpack.c.l.b16 %v1043
        %v1140 = vunpack.c.l.b16 %v1044
        %v1141 = vunpack.c.l.b16 %v1045
        %v1142 = vunpack.c.l.b16 %v1046
        %v1143 = vunpack.c.l.b16 %v1047
        %v1144 = vunpack.c.l.b16 %v1048
        %v1145 = vunpack.c.l.b16 %v1049
        %v1146 = vunpack.c.l.b16 %v1050
        %v1147 = vunpack.c.l.b16 %v1051
        %v1148 = vunpack.c.l.b16 %v1052
        %v1149 = vunpack.c.l.b16 %v1053
        %v1150 = vunpack.c.l.b16 %v1054
        %v1151 = vunpack.c.l.b16 %v1055
        %v1152 = vunpack.c.l.b16 %v1056
        %v1153 = vunpack.c.l.b16 %v1057
        %v1154 = vunpack.c.l.b16 %v1058
        %v1155 = vunpack.c.l.b16 %v1059
        %v1156 = vunpack.c.l.b16 %v1060
        %v1157 = vunpack.c.l.b16 %v1061
        %v1158 = vunpack.c.l.b16 %v1062
        %v1159 = vunpack.c.l.b16 %v1063
        %v1160 = vunpack.c.l.b16 %v1064
        %v1161 = vunpack.c.l.b16 %v1065
        %v1162 = vunpack.c.l.b16 %v1066
        %v1163 = vunpack.c.l.b16 %v1067
        %v1164 = vunpack.c.l.b16 %v1068
        %v1165 = vunpack.c.l.b16 %v1069
        %v1166 = vunpack.c.l.b16 %v1070
        %v1167 = vunpack.c.l.b16 %v1071
        %v1168 = vunpack.c.l.b16 %v1072
        %v1169 = vunpack.c.l.b16 %v1073
        %v1170 = vunpack.c.l.b16 %v1074
        %v1171 = vpack.c.b16 %v1124, %v1123
        %v1172 = vpack.c.b16 %v1126, %v1125
        %v1173 = vpack.c.b16 %v1128, %v1127
        %v1174 = vpack.c.b16 %v1130, %v1129
        %v1175 = vpack.c.b16 %v1132, %v1131
        %v1176 = vpack.c.b16 %v1134, %v1133
        %v1177 = vpack.c.b16 %v1136, %v1135
        %v1178 = vpack.c.b16 %v1138, %v1137
        %v1179 = vpack.c.b16 %v1140, %v1139
        %v1180 = vpack.c.b16 %v1142, %v1141
        %v1181 = vpack.c.b16 %v1144, %v1143
        %v1182 = vpack.c.b16 %v1146, %v1145
        %v1183 = vpack.c.b16 %v1148, %v1147
        %v1184 = vpack.c.b16 %v1150, %v1149
        %v1185 = vpack.c.b16 %v1152, %v1151
        %v1186 = vpack.c.b16 %v1154, %v1153
        %v1187 = vpack.c.b16 %v1156, %v1155
        %v1188 = vpack.c.b16 %v1158, %v1157
        %v1189 = vpack.c.b16 %v1160, %v1159
        %v1190 = vpack.c.b16 %v1162, %v1161
        %v1191 = vpack.c.b16 %v1164, %v1163
        %v1192 = vpack.c.b16 %v1166, %v1165
        %v1193 = vpack.c.b16 %v1168, %v1167
        %v1194 = vpack.c.b16 %v1170, %v1169
        %1219 = vmatprep.subr.bf16.mxu0 0
        %1220 = vmatpush1.bf16.msra.mxu0 %v1171
        %1221 = vmatprep.subr.bf16.mxu0 0
        %1222 = vmatpush1.bf16.msra.mxu0 %v1172
        %1223 = vmatprep.subr.bf16.mxu0 0
        %1224 = vmatpush1.bf16.msra.mxu0 %v1173
        %1225 = vmatprep.subr.bf16.mxu0 0
        %1226 = vmatpush1.bf16.msra.mxu0 %v1174
        %1227 = vmatprep.subr.bf16.mxu0 0
        %1228 = vmatpush1.bf16.msra.mxu0 %v1175
        %1229 = vmatprep.subr.bf16.mxu0 0
        %1230 = vmatpush1.bf16.msra.mxu0 %v1176
        %1231 = vmatprep.subr.bf16.mxu0 0
        %1232 = vmatpush1.bf16.msra.mxu0 %v1177
        %1233 = vmatprep.subr.bf16.mxu0 0
        %1234 = vmatpush1.bf16.msra.mxu0 %v1178
        %1235 = vmatprep.subr.bf16.mxu0 0
        %1236 = vmatpush1.bf16.msra.mxu0 %v1179
        %1237 = vmatprep.subr.bf16.mxu0 0
        %1238 = vmatpush1.bf16.msra.mxu0 %v1180
        %1239 = vmatprep.subr.bf16.mxu0 0
        %1240 = vmatpush1.bf16.msra.mxu0 %v1181
        %1241 = vmatprep.subr.bf16.mxu0 0
        %1242 = vmatpush1.bf16.msra.mxu0 %v1182
        %1243 = vmatprep.subr.bf16.mxu0 0
        %1244 = vmatpush1.bf16.msra.mxu0 %v1183
        %1245 = vmatprep.subr.bf16.mxu0 0
        %1246 = vmatpush1.bf16.msra.mxu0 %v1184
        %1247 = vmatprep.subr.bf16.mxu0 0
        %1248 = vmatpush1.bf16.msra.mxu0 %v1185
        %1249 = vmatprep.subr.bf16.mxu0 0
        %1250 = vmatpush1.bf16.msra.mxu0 %v1186
        %1251 = vmatprep.mubr.bf16.mxu0 %v880
        %1252 = vmatmul.mubr.bf16.gmra.mrb[0].mxu0 %v797
        %v1253 = vpop.f32.mrb[0].mxu0
        %v1254 = vadd.f32 0.0, %v1253
        %v1255 = vpop.f32.mrb[0].mxu0
        %v1256 = vpop.f32.mrb[0].mxu0
        %v1257 = vadd.f32 0.0, %v1256
        %v1258 = vpop.f32.mrb[0].mxu0
        %1259 = vmatprep.mubr.bf16.mxu0 %v892
        %1260 = vmatmul.mubr.bf16.gmra.mrb[0].mxu0 %v798
        %v1261 = vpop.f32.mrb[0].mxu0
        %v1262 = vadd.f32 0.0, %v1261
        %v1263 = vpop.f32.mrb[0].mxu0
        %v1264 = vpop.f32.mrb[0].mxu0
        %v1265 = vadd.f32 0.0, %v1264
        %v1266 = vpop.f32.mrb[0].mxu0
        %1267 = vmatprep.mubr.bf16.mxu0 %v904
        %1268 = vmatmul.mubr.bf16.gmra.mrb[0].mxu0 %v799
        %v1269 = vpop.f32.mrb[0].mxu0
        %v1270 = vadd.f32 0.0, %v1269
        %v1271 = vpop.f32.mrb[0].mxu0
        %v1272 = vpop.f32.mrb[0].mxu0
        %v1273 = vadd.f32 0.0, %v1272
        %v1274 = vpop.f32.mrb[0].mxu0
        %1275 = vmatprep.mubr.bf16.mxu0 %v916
        %1276 = vmatmul.mubr.bf16.gmra.mrb[0].mxu0 %v800
        %v1277 = vpop.f32.mrb[0].mxu0
        %v1278 = vadd.f32 0.0, %v1277
        %v1279 = vpop.f32.mrb[0].mxu0
        %v1280 = vpop.f32.mrb[0].mxu0
        %v1281 = vadd.f32 0.0, %v1280
        %v1282 = vpop.f32.mrb[0].mxu0
        %1283 = vdwg.mxu0
        %1284 = vmatprep.subr.bf16.mxu0 0
        %1285 = vmatpush1.bf16.msra.mxu0 %v1187
        %1286 = vmatprep.subr.bf16.mxu0 0
        %1287 = vmatpush1.bf16.msra.mxu0 %v1188
        %1288 = vmatprep.subr.bf16.mxu0 0
        %1289 = vmatpush1.bf16.msra.mxu0 %v1189
        %1290 = vmatprep.subr.bf16.mxu0 0
        %1291 = vmatpush1.bf16.msra.mxu0 %v1190
        %1292 = vmatprep.subr.bf16.mxu0 0
        %1293 = vmatpush1.bf16.msra.mxu0 %v1191
        %1294 = vmatprep.subr.bf16.mxu0 0
        %1295 = vmatpush1.bf16.msra.mxu0 %v1192
        %1296 = vmatprep.subr.bf16.mxu0 0
        %1297 = vmatpush1.bf16.msra.mxu0 %v1193
        %1298 = vmatprep.subr.bf16.mxu0 0
        %1299 = vmatpush1.bf16.msra.mxu0 %v1194
        %1300 = vmatprep.subr.bf16.mxu0 0
        %1301 = vmatpush1.bf16.msra.mxu0 0
        %1302 = vmatprep.subr.bf16.mxu0 0
        %1303 = vmatpush1.bf16.msra.mxu0 0
        %1304 = vmatprep.subr.bf16.mxu0 0
        %1305 = vmatpush1.bf16.msra.mxu0 0
        %1306 = vmatprep.subr.bf16.mxu0 0
        %1307 = vmatpush1.bf16.msra.mxu0 0
        %1308 = vmatprep.subr.bf16.mxu0 0
        %1309 = vmatpush1.bf16.msra.mxu0 0
        %1310 = vmatprep.subr.bf16.mxu0 0
        %1311 = vmatpush1.bf16.msra.mxu0 0
        %1312 = vmatprep.subr.bf16.mxu0 0
        %1313 = vmatpush1.bf16.msra.mxu0 0
        %1314 = vmatprep.subr.bf16.mxu0 0
        %1315 = vmatpush1.bf16.msra.mxu0 0
        %1316 = vmatprep.mubr.bf16.mxu0 0
        %1317 = vmatmul.mubr.bf16.gmra.mrb[0].mxu0 %v959
        %v1318 = vpop.f32.mrb[0].mxu0
        %v1319 = vadd.f32 %v1254, %v1318
        %v1320 = vpop.f32.mrb[0].mxu0
        %v1321 = vpop.f32.mrb[0].mxu0
        %v1322 = vadd.f32 %v1257, %v1321
        %v1323 = vpop.f32.mrb[0].mxu0
        %1324 = vmatprep.mubr.bf16.mxu0 0
        %1325 = vmatmul.mubr.bf16.gmra.mrb[0].mxu0 %v962
        %v1326 = vpop.f32.mrb[0].mxu0
        %v1327 = vadd.f32 %v1262, %v1326
        %v1328 = vpop.f32.mrb[0].mxu0
        %v1329 = vpop.f32.mrb[0].mxu0
        %v1330 = vadd.f32 %v1265, %v1329
        %v1331 = vpop.f32.mrb[0].mxu0
        %1332 = vmatprep.mubr.bf16.mxu0 0
        %1333 = vmatmul.mubr.bf16.gmra.mrb[0].mxu0 %v965
        %v1334 = vpop.f32.mrb[0].mxu0
        %v1335 = vadd.f32 %v1270, %v1334
        %v1336 = vpop.f32.mrb[0].mxu0
        %v1337 = vpop.f32.mrb[0].mxu0
        %v1338 = vadd.f32 %v1273, %v1337
        %v1339 = vpop.f32.mrb[0].mxu0
        %1340 = vmatprep.mubr.bf16.mxu0 0
        %1341 = vmatmul.mubr.bf16.gmra.mrb[0].mxu0 %v968
        %v1342 = vpop.f32.mrb[0].mxu0
        %v1343 = vadd.f32 %v1278, %v1342
        %v1344 = vpop.f32.mrb[0].mxu0
        %v1345 = vpop.f32.mrb[0].mxu0
        %v1346 = vadd.f32 %v1281, %v1345
        %v1347 = vpop.f32.mrb[0].mxu0
        %1348 = vdwg.mxu0
        %v1397 = vunpack.c.l.b16 %v978
        %v1398 = vunpack.c.l.b16 %v979
        %v1399 = vunpack.c.l.b16 %v980
        %v1400 = vunpack.c.l.b16 %v981
        %v1401 = vunpack.c.l.b16 %v982
        %v1402 = vunpack.c.l.b16 %v983
        %v1403 = vunpack.c.l.b16 %v984
        %v1404 = vunpack.c.l.b16 %v985
        %v1405 = vunpack.c.l.b16 %v986
        %v1406 = vunpack.c.l.b16 %v987
        %v1407 = vunpack.c.l.b16 %v988
        %v1408 = vunpack.c.l.b16 %v989
        %v1409 = vunpack.c.l.b16 %v990
        %v1410 = vunpack.c.l.b16 %v991
        %v1411 = vunpack.c.l.b16 %v992
        %v1412 = vunpack.c.l.b16 %v993
        %v1413 = vunpack.c.l.b16 %v994
        %v1414 = vunpack.c.l.b16 %v995
        %v1415 = vunpack.c.l.b16 %v996
        %v1416 = vunpack.c.l.b16 %v997
        %v1417 = vunpack.c.l.b16 %v998
        %v1418 = vunpack.c.l.b16 %v999
        %v1419 = vunpack.c.l.b16 %v1000
        %v1420 = vunpack.c.l.b16 %v1001
        %v1421 = vunpack.c.l.b16 %v1002
        %v1422 = vunpack.c.l.b16 %v1003
        %v1423 = vunpack.c.l.b16 %v1004
        %v1424 = vunpack.c.l.b16 %v1005
        %v1425 = vunpack.c.l.b16 %v1006
        %v1426 = vunpack.c.l.b16 %v1007
        %v1427 = vunpack.c.l.b16 %v1008
        %v1428 = vunpack.c.l.b16 %v1009
        %v1429 = vunpack.c.l.b16 %v1010
        %v1430 = vunpack.c.l.b16 %v1011
        %v1431 = vunpack.c.l.b16 %v1012
        %v1432 = vunpack.c.l.b16 %v1013
        %v1433 = vunpack.c.l.b16 %v1014
        %v1434 = vunpack.c.l.b16 %v1015
        %v1435 = vunpack.c.l.b16 %v1016
        %v1436 = vunpack.c.l.b16 %v1017
        %v1437 = vunpack.c.l.b16 %v1018
        %v1438 = vunpack.c.l.b16 %v1019
        %v1439 = vunpack.c.l.b16 %v1020
        %v1440 = vunpack.c.l.b16 %v1021
        %v1441 = vunpack.c.l.b16 %v1022
        %v1442 = vunpack.c.l.b16 %v1023
        %v1443 = vunpack.c.l.b16 %v1024
        %v1444 = vunpack.c.l.b16 %v1025
        %v1445 = vpack.c.b16 %v1398, %v1397
        %v1446 = vpack.c.b16 %v1400, %v1399
        %v1447 = vpack.c.b16 %v1402, %v1401
        %v1448 = vpack.c.b16 %v1404, %v1403
        %v1449 = vpack.c.b16 %v1406, %v1405
        %v1450 = vpack.c.b16 %v1408, %v1407
        %v1451 = vpack.c.b16 %v1410, %v1409
        %v1452 = vpack.c.b16 %v1412, %v1411
        %v1453 = vpack.c.b16 %v1414, %v1413
        %v1454 = vpack.c.b16 %v1416, %v1415
        %v1455 = vpack.c.b16 %v1418, %v1417
        %v1456 = vpack.c.b16 %v1420, %v1419
        %v1457 = vpack.c.b16 %v1422, %v1421
        %v1458 = vpack.c.b16 %v1424, %v1423
        %v1459 = vpack.c.b16 %v1426, %v1425
        %v1460 = vpack.c.b16 %v1428, %v1427
        %v1461 = vpack.c.b16 %v1430, %v1429
        %v1462 = vpack.c.b16 %v1432, %v1431
        %v1463 = vpack.c.b16 %v1434, %v1433
        %v1464 = vpack.c.b16 %v1436, %v1435
        %v1465 = vpack.c.b16 %v1438, %v1437
        %v1466 = vpack.c.b16 %v1440, %v1439
        %v1467 = vpack.c.b16 %v1442, %v1441
        %v1468 = vpack.c.b16 %v1444, %v1443
        %1493 = vmatprep.subr.bf16.mxu0 0
        %1494 = vmatpush1.bf16.msra.mxu0 %v1445
        %1495 = vmatprep.subr.bf16.mxu0 0
        %1496 = vmatpush1.bf16.msra.mxu0 %v1446
        %1497 = vmatprep.subr.bf16.mxu0 0
        %1498 = vmatpush1.bf16.msra.mxu0 %v1447
        %1499 = vmatprep.subr.bf16.mxu0 0
        %1500 = vmatpush1.bf16.msra.mxu0 %v1448
        %1501 = vmatprep.subr.bf16.mxu0 0
        %1502 = vmatpush1.bf16.msra.mxu0 %v1449
        %1503 = vmatprep.subr.bf16.mxu0 0
        %1504 = vmatpush1.bf16.msra.mxu0 %v1450
        %1505 = vmatprep.subr.bf16.mxu0 0
        %1506 = vmatpush1.bf16.msra.mxu0 %v1451
        %1507 = vmatprep.subr.bf16.mxu0 0
        %1508 = vmatpush1.bf16.msra.mxu0 %v1452
        %1509 = vmatprep.subr.bf16.mxu0 0
        %1510 = vmatpush1.bf16.msra.mxu0 %v1453
        %1511 = vmatprep.subr.bf16.mxu0 0
        %1512 = vmatpush1.bf16.msra.mxu0 %v1454
        %1513 = vmatprep.subr.bf16.mxu0 0
        %1514 = vmatpush1.bf16.msra.mxu0 %v1455
        %1515 = vmatprep.subr.bf16.mxu0 0
        %1516 = vmatpush1.bf16.msra.mxu0 %v1456
        %1517 = vmatprep.subr.bf16.mxu0 0
        %1518 = vmatpush1.bf16.msra.mxu0 %v1457
        %1519 = vmatprep.subr.bf16.mxu0 0
        %1520 = vmatpush1.bf16.msra.mxu0 %v1458
        %1521 = vmatprep.subr.bf16.mxu0 0
        %1522 = vmatpush1.bf16.msra.mxu0 %v1459
        %1523 = vmatprep.subr.bf16.mxu0 0
        %1524 = vmatpush1.bf16.msra.mxu0 %v1460
        %1525 = vmatprep.mubr.bf16.mxu0 %v868
        %1526 = vmatmul.mubr.bf16.gmra.mrb[0].mxu0 %v796
        %v1527 = vpop.f32.mrb[0].mxu0
        %v1528 = vadd.f32 %v1319, %v1527
        %v1529 = vpop.f32.mrb[0].mxu0
        %v1530 = vpop.f32.mrb[0].mxu0
        %v1531 = vadd.f32 %v1322, %v1530
        %v1532 = vpop.f32.mrb[0].mxu0
        %1533 = vmatprep.mubr.bf16.mxu0 %v880
        %1534 = vmatmul.mubr.bf16.gmra.mrb[0].mxu0 %v797
        %v1535 = vpop.f32.mrb[0].mxu0
        %v1536 = vadd.f32 %v1327, %v1535
        %v1537 = vpop.f32.mrb[0].mxu0
        %v1538 = vpop.f32.mrb[0].mxu0
        %v1539 = vadd.f32 %v1330, %v1538
        %v1540 = vpop.f32.mrb[0].mxu0
        %1541 = vmatprep.mubr.bf16.mxu0 %v892
        %1542 = vmatmul.mubr.bf16.gmra.mrb[0].mxu0 %v798
        %v1543 = vpop.f32.mrb[0].mxu0
        %v1544 = vadd.f32 %v1335, %v1543
        %v1545 = vpop.f32.mrb[0].mxu0
        %v1546 = vpop.f32.mrb[0].mxu0
        %v1547 = vadd.f32 %v1338, %v1546
        %v1548 = vpop.f32.mrb[0].mxu0
        %1549 = vmatprep.mubr.bf16.mxu0 %v904
        %1550 = vmatmul.mubr.bf16.gmra.mrb[0].mxu0 %v799
        %v1551 = vpop.f32.mrb[0].mxu0
        %v1552 = vadd.f32 %v1343, %v1551
        %v1553 = vpop.f32.mrb[0].mxu0
        %v1554 = vpop.f32.mrb[0].mxu0
        %v1555 = vadd.f32 %v1346, %v1554
        %v1556 = vpop.f32.mrb[0].mxu0
        %1557 = vdwg.mxu0
        %1558 = vmatprep.subr.bf16.mxu0 0
        %1559 = vmatpush1.bf16.msra.mxu0 %v1461
        %1560 = vmatprep.subr.bf16.mxu0 0
        %1561 = vmatpush1.bf16.msra.mxu0 %v1462
        %1562 = vmatprep.subr.bf16.mxu0 0
        %1563 = vmatpush1.bf16.msra.mxu0 %v1463
        %1564 = vmatprep.subr.bf16.mxu0 0
        %1565 = vmatpush1.bf16.msra.mxu0 %v1464
        %1566 = vmatprep.subr.bf16.mxu0 0
        %1567 = vmatpush1.bf16.msra.mxu0 %v1465
        %1568 = vmatprep.subr.bf16.mxu0 0
        %1569 = vmatpush1.bf16.msra.mxu0 %v1466
        %1570 = vmatprep.subr.bf16.mxu0 0
        %1571 = vmatpush1.bf16.msra.mxu0 %v1467
        %1572 = vmatprep.subr.bf16.mxu0 0
        %1573 = vmatpush1.bf16.msra.mxu0 %v1468
        %1574 = vmatprep.subr.bf16.mxu0 0
        %1575 = vmatpush1.bf16.msra.mxu0 0
        %1576 = vmatprep.subr.bf16.mxu0 0
        %1577 = vmatpush1.bf16.msra.mxu0 0
        %1578 = vmatprep.subr.bf16.mxu0 0
        %1579 = vmatpush1.bf16.msra.mxu0 0
        %1580 = vmatprep.subr.bf16.mxu0 0
        %1581 = vmatpush1.bf16.msra.mxu0 0
        %1582 = vmatprep.subr.bf16.mxu0 0
        %1583 = vmatpush1.bf16.msra.mxu0 0
        %1584 = vmatprep.subr.bf16.mxu0 0
        %1585 = vmatpush1.bf16.msra.mxu0 0
        %1586 = vmatprep.subr.bf16.mxu0 0
        %1587 = vmatpush1.bf16.msra.mxu0 0
        %1588 = vmatprep.subr.bf16.mxu0 0
        %1589 = vmatpush1.bf16.msra.mxu0 0
        %1590 = vmatprep.mubr.bf16.mxu0 0
        %1591 = vmatmul.mubr.bf16.gmra.mrb[0].mxu0 %v956
        %v1592 = vpop.f32.mrb[0].mxu0
        %v1593 = vadd.f32 %v1528, %v1592
        %v1594 = vpop.f32.mrb[0].mxu0
        %v1595 = vpop.f32.mrb[0].mxu0
        %v1596 = vadd.f32 %v1531, %v1595
        %v1597 = vpop.f32.mrb[0].mxu0
        %1598 = vmatprep.mubr.bf16.mxu0 0
        %1599 = vmatmul.mubr.bf16.gmra.mrb[0].mxu0 %v959
        %v1600 = vpop.f32.mrb[0].mxu0
        %v1601 = vadd.f32 %v1536, %v1600
        %v1602 = vpop.f32.mrb[0].mxu0
        %v1603 = vpop.f32.mrb[0].mxu0
        %v1604 = vadd.f32 %v1539, %v1603
        %v1605 = vpop.f32.mrb[0].mxu0
        %1606 = vmatprep.mubr.bf16.mxu0 0
        %1607 = vmatmul.mubr.bf16.gmra.mrb[0].mxu0 %v962
        %v1608 = vpop.f32.mrb[0].mxu0
        %v1609 = vadd.f32 %v1544, %v1608
        %v1610 = vpop.f32.mrb[0].mxu0
        %v1611 = vpop.f32.mrb[0].mxu0
        %v1612 = vadd.f32 %v1547, %v1611
        %v1613 = vpop.f32.mrb[0].mxu0
        %1614 = vmatprep.mubr.bf16.mxu0 0
        %1615 = vmatmul.mubr.bf16.gmra.mrb[0].mxu0 %v965
        %v1616 = vpop.f32.mrb[0].mxu0
        %v1617 = vadd.f32 %v1552, %v1616
        %v1618 = vpop.f32.mrb[0].mxu0
        %v1619 = vpop.f32.mrb[0].mxu0
        %v1620 = vadd.f32 %v1555, %v1619
        %v1621 = vpop.f32.mrb[0].mxu0
        %1622 = vdwg.mxu0
        %s1623 = scalar_lea.vmem [#allocation9], 384
        %v1624 = vld [vmem:[%s1623] sm:$0xf]
        %v1625 = vld [vmem:[%s1623 + $0x4] sm:$0xf]
        %v1626 = vld [vmem:[%s1623 + $0x8] sm:$0xf]
        %v1627 = vld [vmem:[%s1623 + $0xc] sm:$0xf]
        %v1628 = vld [vmem:[%s1623 + $0x10] sm:$0xf]
        %v1629 = vld [vmem:[%s1623 + $0x14] sm:$0xf]
        %v1630 = vld [vmem:[%s1623 + $0x18] sm:$0xf]
        %v1631 = vld [vmem:[%s1623 + $0x1c] sm:$0xf]
        %v1632 = vld [vmem:[%s1623 + $0x20] sm:$0xf]
        %v1633 = vld [vmem:[%s1623 + $0x24] sm:$0xf]
        %v1634 = vld [vmem:[%s1623 + $0x28] sm:$0xf]
        %v1635 = vld [vmem:[%s1623 + $0x2c] sm:$0xf]
        %v1636 = vld [vmem:[%s1623 + $0x30] sm:$0xf]
        %v1637 = vld [vmem:[%s1623 + $0x34] sm:$0xf]
        %v1638 = vld [vmem:[%s1623 + $0x38] sm:$0xf]
        %v1639 = vld [vmem:[%s1623 + $0x3c] sm:$0xf]
        %v1640 = vld [vmem:[%s1623 + $0x40] sm:$0xf]
        %v1641 = vld [vmem:[%s1623 + $0x44] sm:$0xf]
        %v1642 = vld [vmem:[%s1623 + $0x48] sm:$0xf]
        %v1643 = vld [vmem:[%s1623 + $0x4c] sm:$0xf]
        %v1644 = vld [vmem:[%s1623 + $0x50] sm:$0xf]
        %v1645 = vld [vmem:[%s1623 + $0x54] sm:$0xf]
        %v1646 = vld [vmem:[%s1623 + $0x58] sm:$0xf]
        %v1647 = vld [vmem:[%s1623 + $0x5c] sm:$0xf]
        %v1648 = vld [vmem:[%s1623 + $0x60] sm:$0xf]
        %v1649 = vld [vmem:[%s1623 + $0x64] sm:$0xf]
        %v1650 = vld [vmem:[%s1623 + $0x68] sm:$0xf]
        %v1651 = vld [vmem:[%s1623 + $0x6c] sm:$0xf]
        %v1652 = vld [vmem:[%s1623 + $0x70] sm:$0xf]
        %v1653 = vld [vmem:[%s1623 + $0x74] sm:$0xf]
        %v1654 = vld [vmem:[%s1623 + $0x78] sm:$0xf]
        %v1655 = vld [vmem:[%s1623 + $0x7c] sm:$0xf]
        %v1656 = vld [vmem:[%s1623 + $0x80] sm:$0xf]
        %v1657 = vld [vmem:[%s1623 + $0x84] sm:$0xf]
        %v1658 = vld [vmem:[%s1623 + $0x88] sm:$0xf]
        %v1659 = vld [vmem:[%s1623 + $0x8c] sm:$0xf]
        %v1660 = vld [vmem:[%s1623 + $0x90] sm:$0xf]
        %v1661 = vld [vmem:[%s1623 + $0x94] sm:$0xf]
        %v1662 = vld [vmem:[%s1623 + $0x98] sm:$0xf]
        %v1663 = vld [vmem:[%s1623 + $0x9c] sm:$0xf]
        %v1664 = vld [vmem:[%s1623 + $0xa0] sm:$0xf]
        %v1665 = vld [vmem:[%s1623 + $0xa4] sm:$0xf]
        %v1666 = vld [vmem:[%s1623 + $0xa8] sm:$0xf]
        %v1667 = vld [vmem:[%s1623 + $0xac] sm:$0xf]
        %v1668 = vld [vmem:[%s1623 + $0xb0] sm:$0xf]
        %v1669 = vld [vmem:[%s1623 + $0xb4] sm:$0xf]
        %v1670 = vld [vmem:[%s1623 + $0xb8] sm:$0xf]
        %v1671 = vld [vmem:[%s1623 + $0xbc] sm:$0xf]
        %v1720 = vunpack.c.l.b16 %v1624
        %v1721 = vunpack.c.l.b16 %v1625
        %v1722 = vunpack.c.l.b16 %v1626
        %v1723 = vunpack.c.l.b16 %v1627
        %v1724 = vunpack.c.l.b16 %v1628
        %v1725 = vunpack.c.l.b16 %v1629
        %v1726 = vunpack.c.l.b16 %v1630
        %v1727 = vunpack.c.l.b16 %v1631
        %v1728 = vunpack.c.l.b16 %v1632
        %v1729 = vunpack.c.l.b16 %v1633
        %v1730 = vunpack.c.l.b16 %v1634
        %v1731 = vunpack.c.l.b16 %v1635
        %v1732 = vunpack.c.l.b16 %v1636
        %v1733 = vunpack.c.l.b16 %v1637
        %v1734 = vunpack.c.l.b16 %v1638
        %v1735 = vunpack.c.l.b16 %v1639
        %v1736 = vunpack.c.l.b16 %v1640
        %v1737 = vunpack.c.l.b16 %v1641
        %v1738 = vunpack.c.l.b16 %v1642
        %v1739 = vunpack.c.l.b16 %v1643
        %v1740 = vunpack.c.l.b16 %v1644
        %v1741 = vunpack.c.l.b16 %v1645
        %v1742 = vunpack.c.l.b16 %v1646
        %v1743 = vunpack.c.l.b16 %v1647
        %v1744 = vunpack.c.l.b16 %v1648
        %v1745 = vunpack.c.l.b16 %v1649
        %v1746 = vunpack.c.l.b16 %v1650
        %v1747 = vunpack.c.l.b16 %v1651
        %v1748 = vunpack.c.l.b16 %v1652
        %v1749 = vunpack.c.l.b16 %v1653
        %v1750 = vunpack.c.l.b16 %v1654
        %v1751 = vunpack.c.l.b16 %v1655
        %v1752 = vunpack.c.l.b16 %v1656
        %v1753 = vunpack.c.l.b16 %v1657
        %v1754 = vunpack.c.l.b16 %v1658
        %v1755 = vunpack.c.l.b16 %v1659
        %v1756 = vunpack.c.l.b16 %v1660
        %v1757 = vunpack.c.l.b16 %v1661
        %v1758 = vunpack.c.l.b16 %v1662
        %v1759 = vunpack.c.l.b16 %v1663
        %v1760 = vunpack.c.l.b16 %v1664
        %v1761 = vunpack.c.l.b16 %v1665
        %v1762 = vunpack.c.l.b16 %v1666
        %v1763 = vunpack.c.l.b16 %v1667
        %v1764 = vunpack.c.l.b16 %v1668
        %v1765 = vunpack.c.l.b16 %v1669
        %v1766 = vunpack.c.l.b16 %v1670
        %v1767 = vunpack.c.l.b16 %v1671
        %v1768 = vpack.c.b16 %v1721, %v1720
        %v1769 = vpack.c.b16 %v1723, %v1722
        %v1770 = vpack.c.b16 %v1725, %v1724
        %v1771 = vpack.c.b16 %v1727, %v1726
        %v1772 = vpack.c.b16 %v1729, %v1728
        %v1773 = vpack.c.b16 %v1731, %v1730
        %v1774 = vpack.c.b16 %v1733, %v1732
        %v1775 = vpack.c.b16 %v1735, %v1734
        %v1776 = vpack.c.b16 %v1737, %v1736
        %v1777 = vpack.c.b16 %v1739, %v1738
        %v1778 = vpack.c.b16 %v1741, %v1740
        %v1779 = vpack.c.b16 %v1743, %v1742
        %v1780 = vpack.c.b16 %v1745, %v1744
        %v1781 = vpack.c.b16 %v1747, %v1746
        %v1782 = vpack.c.b16 %v1749, %v1748
        %v1783 = vpack.c.b16 %v1751, %v1750
        %v1784 = vpack.c.b16 %v1753, %v1752
        %v1785 = vpack.c.b16 %v1755, %v1754
        %v1786 = vpack.c.b16 %v1757, %v1756
        %v1787 = vpack.c.b16 %v1759, %v1758
        %v1788 = vpack.c.b16 %v1761, %v1760
        %v1789 = vpack.c.b16 %v1763, %v1762
        %v1790 = vpack.c.b16 %v1765, %v1764
        %v1791 = vpack.c.b16 %v1767, %v1766
        %1816 = vmatprep.subr.bf16.mxu0 0
        %1817 = vmatpush1.bf16.msra.mxu0 %v1768
        %1818 = vmatprep.subr.bf16.mxu0 0
        %1819 = vmatpush1.bf16.msra.mxu0 %v1769
        %1820 = vmatprep.subr.bf16.mxu0 0
        %1821 = vmatpush1.bf16.msra.mxu0 %v1770
        %1822 = vmatprep.subr.bf16.mxu0 0
        %1823 = vmatpush1.bf16.msra.mxu0 %v1771
        %1824 = vmatprep.subr.bf16.mxu0 0
        %1825 = vmatpush1.bf16.msra.mxu0 %v1772
        %1826 = vmatprep.subr.bf16.mxu0 0
        %1827 = vmatpush1.bf16.msra.mxu0 %v1773
        %1828 = vmatprep.subr.bf16.mxu0 0
        %1829 = vmatpush1.bf16.msra.mxu0 %v1774
        %1830 = vmatprep.subr.bf16.mxu0 0
        %1831 = vmatpush1.bf16.msra.mxu0 %v1775
        %1832 = vmatprep.subr.bf16.mxu0 0
        %1833 = vmatpush1.bf16.msra.mxu0 %v1776
        %1834 = vmatprep.subr.bf16.mxu0 0
        %1835 = vmatpush1.bf16.msra.mxu0 %v1777
        %1836 = vmatprep.subr.bf16.mxu0 0
        %1837 = vmatpush1.bf16.msra.mxu0 %v1778
        %1838 = vmatprep.subr.bf16.mxu0 0
        %1839 = vmatpush1.bf16.msra.mxu0 %v1779
        %1840 = vmatprep.subr.bf16.mxu0 0
        %1841 = vmatpush1.bf16.msra.mxu0 %v1780
        %1842 = vmatprep.subr.bf16.mxu0 0
        %1843 = vmatpush1.bf16.msra.mxu0 %v1781
        %1844 = vmatprep.subr.bf16.mxu0 0
        %1845 = vmatpush1.bf16.msra.mxu0 %v1782
        %1846 = vmatprep.subr.bf16.mxu0 0
        %1847 = vmatpush1.bf16.msra.mxu0 %v1783
        %1848 = vmatprep.mubr.bf16.mxu0 %v892
        %1849 = vmatmul.mubr.bf16.gmra.mrb[0].mxu0 %v798
        %v1850 = vpop.f32.mrb[0].mxu0
        %v1851 = vadd.f32 0.0, %v1850
        %v1852 = vpop.f32.mrb[0].mxu0
        %v1853 = vpop.f32.mrb[0].mxu0
        %v1854 = vadd.f32 0.0, %v1853
        %v1855 = vpop.f32.mrb[0].mxu0
        %1856 = vmatprep.mubr.bf16.mxu0 %v904
        %1857 = vmatmul.mubr.bf16.gmra.mrb[0].mxu0 %v799
        %v1858 = vpop.f32.mrb[0].mxu0
        %v1859 = vadd.f32 0.0, %v1858
        %v1860 = vpop.f32.mrb[0].mxu0
        %v1861 = vpop.f32.mrb[0].mxu0
        %v1862 = vadd.f32 0.0, %v1861
        %v1863 = vpop.f32.mrb[0].mxu0
        %1864 = vmatprep.mubr.bf16.mxu0 %v916
        %1865 = vmatmul.mubr.bf16.gmra.mrb[0].mxu0 %v800
        %v1866 = vpop.f32.mrb[0].mxu0
        %v1867 = vadd.f32 0.0, %v1866
        %v1868 = vpop.f32.mrb[0].mxu0
        %v1869 = vpop.f32.mrb[0].mxu0
        %v1870 = vadd.f32 0.0, %v1869
        %v1871 = vpop.f32.mrb[0].mxu0
        %1872 = vmatprep.mubr.bf16.mxu0 %v928
        %1873 = vmatmul.mubr.bf16.gmra.mrb[0].mxu0 %v801
        %v1874 = vpop.f32.mrb[0].mxu0
        %v1875 = vadd.f32 0.0, %v1874
        %v1876 = vpop.f32.mrb[0].mxu0
        %v1877 = vpop.f32.mrb[0].mxu0
        %v1878 = vadd.f32 0.0, %v1877
        %v1879 = vpop.f32.mrb[0].mxu0
        %1880 = vdwg.mxu0
        %1881 = vmatprep.subr.bf16.mxu0 0
        %1882 = vmatpush1.bf16.msra.mxu0 %v1784
        %1883 = vmatprep.subr.bf16.mxu0 0
        %1884 = vmatpush1.bf16.msra.mxu0 %v1785
        %1885 = vmatprep.subr.bf16.mxu0 0
        %1886 = vmatpush1.bf16.msra.mxu0 %v1786
        %1887 = vmatprep.subr.bf16.mxu0 0
        %1888 = vmatpush1.bf16.msra.mxu0 %v1787
        %1889 = vmatprep.subr.bf16.mxu0 0
        %1890 = vmatpush1.bf16.msra.mxu0 %v1788
        %1891 = vmatprep.subr.bf16.mxu0 0
        %1892 = vmatpush1.bf16.msra.mxu0 %v1789
        %1893 = vmatprep.subr.bf16.mxu0 0
        %1894 = vmatpush1.bf16.msra.mxu0 %v1790
        %1895 = vmatprep.subr.bf16.mxu0 0
        %1896 = vmatpush1.bf16.msra.mxu0 %v1791
        %1897 = vmatprep.subr.bf16.mxu0 0
        %1898 = vmatpush1.bf16.msra.mxu0 0
        %1899 = vmatprep.subr.bf16.mxu0 0
        %1900 = vmatpush1.bf16.msra.mxu0 0
        %1901 = vmatprep.subr.bf16.mxu0 0
        %1902 = vmatpush1.bf16.msra.mxu0 0
        %1903 = vmatprep.subr.bf16.mxu0 0
        %1904 = vmatpush1.bf16.msra.mxu0 0
        %1905 = vmatprep.subr.bf16.mxu0 0
        %1906 = vmatpush1.bf16.msra.mxu0 0
        %1907 = vmatprep.subr.bf16.mxu0 0
        %1908 = vmatpush1.bf16.msra.mxu0 0
        %1909 = vmatprep.subr.bf16.mxu0 0
        %1910 = vmatpush1.bf16.msra.mxu0 0
        %1911 = vmatprep.subr.bf16.mxu0 0
        %1912 = vmatpush1.bf16.msra.mxu0 0
        %1913 = vmatprep.mubr.bf16.mxu0 0
        %1914 = vmatmul.mubr.bf16.gmra.mrb[0].mxu0 %v962
        %v1915 = vpop.f32.mrb[0].mxu0
        %v1916 = vadd.f32 %v1851, %v1915
        %v1917 = vpop.f32.mrb[0].mxu0
        %v1918 = vpop.f32.mrb[0].mxu0
        %v1919 = vadd.f32 %v1854, %v1918
        %v1920 = vpop.f32.mrb[0].mxu0
        %1921 = vmatprep.mubr.bf16.mxu0 0
        %1922 = vmatmul.mubr.bf16.gmra.mrb[0].mxu0 %v965
        %v1923 = vpop.f32.mrb[0].mxu0
        %v1924 = vadd.f32 %v1859, %v1923
        %v1925 = vpop.f32.mrb[0].mxu0
        %v1926 = vpop.f32.mrb[0].mxu0
        %v1927 = vadd.f32 %v1862, %v1926
        %v1928 = vpop.f32.mrb[0].mxu0
        %1929 = vmatprep.mubr.bf16.mxu0 0
        %1930 = vmatmul.mubr.bf16.gmra.mrb[0].mxu0 %v968
        %v1931 = vpop.f32.mrb[0].mxu0
        %v1932 = vadd.f32 %v1867, %v1931
        %v1933 = vpop.f32.mrb[0].mxu0
        %v1934 = vpop.f32.mrb[0].mxu0
        %v1935 = vadd.f32 %v1870, %v1934
        %v1936 = vpop.f32.mrb[0].mxu0
        %1937 = vmatprep.mubr.bf16.mxu0 0
        %1938 = vmatmul.mubr.bf16.gmra.mrb[0].mxu0 %v971
        %v1939 = vpop.f32.mrb[0].mxu0
        %v1940 = vadd.f32 %v1875, %v1939
        %v1941 = vpop.f32.mrb[0].mxu0
        %v1942 = vpop.f32.mrb[0].mxu0
        %v1943 = vadd.f32 %v1878, %v1942
        %v1944 = vpop.f32.mrb[0].mxu0
        %1945 = vdwg.mxu0
        %v1946 = vadd.f32 %v1593, %v1916
        %v1947 = vadd.f32 %v1596, %v1919
        %v1948 = vadd.f32 %v1601, %v1924
        %v1949 = vadd.f32 %v1604, %v1927
        %v1950 = vadd.f32 %v1609, %v1932
        %v1951 = vadd.f32 %v1612, %v1935
        %v1952 = vadd.f32 %v1617, %v1940
        %v1953 = vadd.f32 %v1620, %v1943
        %v1954 = vld [vmem:[%s4] sm:$0x1]
        %v1956 = vlaneseq
        %v1957 = vshrl.u32 %v1956, 7
        %v1958 = vsub.s32 0, %v1957
        %v1959 = vrot.slane %v1954, %v1958
        %v1961 = vadd.f32 %v1946, %v1959
        %v1962 = vadd.f32 %v1947, %v1959
        %v1963 = vadd.f32 %v1948, %v1959
        %v1964 = vadd.f32 %v1949, %v1959
        %v1965 = vadd.f32 %v1950, %v1959
        %v1966 = vadd.f32 %v1951, %v1959
        %v1967 = vadd.f32 %v1952, %v1959
        %v1968 = vadd.f32 %v1953, %v1959
        %v1969 = vmax.f32 %v1961, 0.0
        %v1970 = vmax.f32 %v1962, 0.0
        %v1971 = vmax.f32 %v1963, 0.0
        %v1972 = vmax.f32 %v1964, 0.0
        %v1973 = vmax.f32 %v1965, 0.0
        %v1974 = vmax.f32 %v1966, 0.0
        %v1975 = vmax.f32 %v1967, 0.0
        %v1976 = vmax.f32 %v1968, 0.0
        %v1977 = vpack.c.bf16 %v1970, %v1969
        %v1978 = vpack.c.bf16 %v1972, %v1971
        %v1979 = vpack.c.bf16 %v1974, %v1973
        %v1980 = vpack.c.bf16 %v1976, %v1975
        %v1981 = vld [vmem:[#allocation11] sm:$0xf]
        %v1982 = vld [vmem:[#allocation11 + $0x4] sm:$0xf]
        %v1983 = vld [vmem:[#allocation11 + $0x8] sm:$0xf]
        %v1984 = vld [vmem:[#allocation11 + $0xc] sm:$0xf]
        %v1985 = vld [vmem:[#allocation11 + $0x10] sm:$0xf]
        %v1986 = vld [vmem:[#allocation11 + $0x14] sm:$0xf]
        %v1987 = vld [vmem:[#allocation11 + $0x18] sm:$0xf]
        %v1988 = vld [vmem:[#allocation11 + $0x1c] sm:$0xf]
        %v1989 = vld [vmem:[#allocation11 + $0x20] sm:$0xf]
        %v1990 = vld [vmem:[#allocation11 + $0x24] sm:$0xf]
        %v1991 = vld [vmem:[#allocation11 + $0x28] sm:$0xf]
        %v1992 = vld [vmem:[#allocation11 + $0x2c] sm:$0xf]
        %v1993 = vld [vmem:[#allocation11 + $0x30] sm:$0xf]
        %v1994 = vld [vmem:[#allocation11 + $0x34] sm:$0xf]
        %v1995 = vld [vmem:[#allocation11 + $0x38] sm:$0xf]
        %v1996 = vld [vmem:[#allocation11 + $0x3c] sm:$0xf]
        %v1997 = vld [vmem:[%s6] sm:$0x1]
        %v1999 = vlaneseq
        %v2000 = vshrl.u32 %v1999, 7
        %v2001 = vsub.s32 0, %v2000
        %v2002 = vrot.slane %v1997, %v2001
        %v2020 = vunpack.c.l.b16 %v1981
        %v2021 = vunpack.c.l.b16 %v1982
        %v2022 = vunpack.c.l.b16 %v1983
        %v2023 = vunpack.c.l.b16 %v1984
        %v2024 = vunpack.c.l.b16 %v1985
        %v2025 = vunpack.c.l.b16 %v1986
        %v2026 = vunpack.c.l.b16 %v1987
        %v2027 = vunpack.c.l.b16 %v1988
        %v2028 = vunpack.c.l.b16 %v1989
        %v2029 = vunpack.c.l.b16 %v1990
        %v2030 = vunpack.c.l.b16 %v1991
        %v2031 = vunpack.c.l.b16 %v1992
        %v2032 = vunpack.c.l.b16 %v1993
        %v2033 = vunpack.c.l.b16 %v1994
        %v2034 = vunpack.c.l.b16 %v1995
        %v2035 = vunpack.c.l.b16 %v1996
        %v2036 = vpack.c.b16 %v2021, %v2020
        %v2037 = vpack.c.b16 %v2023, %v2022
        %v2038 = vpack.c.b16 %v2025, %v2024
        %v2039 = vpack.c.b16 %v2027, %v2026
        %v2040 = vpack.c.b16 %v2029, %v2028
        %v2041 = vpack.c.b16 %v2031, %v2030
        %v2042 = vpack.c.b16 %v2033, %v2032
        %v2043 = vpack.c.b16 %v2035, %v2034
        %2052 = vmatprep.subr.bf16.mxu0 0
        %2053 = vmatpush1.bf16.msra.mxu0 %v2036
        %2054 = vmatprep.subr.bf16.mxu0 0
        %2055 = vmatpush1.bf16.msra.mxu0 %v2037
        %2056 = vmatprep.subr.bf16.mxu0 0
        %2057 = vmatpush1.bf16.msra.mxu0 %v2038
        %2058 = vmatprep.subr.bf16.mxu0 0
        %2059 = vmatpush1.bf16.msra.mxu0 %v2039
        %2060 = vmatprep.subr.bf16.mxu0 0
        %2061 = vmatpush1.bf16.msra.mxu0 %v2040
        %2062 = vmatprep.subr.bf16.mxu0 0
        %2063 = vmatpush1.bf16.msra.mxu0 %v2041
        %2064 = vmatprep.subr.bf16.mxu0 0
        %2065 = vmatpush1.bf16.msra.mxu0 %v2042
        %2066 = vmatprep.subr.bf16.mxu0 0
        %2067 = vmatpush1.bf16.msra.mxu0 %v2043
        %2068 = vmatprep.subr.bf16.mxu0 0
        %2069 = vmatpush1.bf16.msra.mxu0 0
        %2070 = vmatprep.subr.bf16.mxu0 0
        %2071 = vmatpush1.bf16.msra.mxu0 0
        %2072 = vmatprep.subr.bf16.mxu0 0
        %2073 = vmatpush1.bf16.msra.mxu0 0
        %2074 = vmatprep.subr.bf16.mxu0 0
        %2075 = vmatpush1.bf16.msra.mxu0 0
        %2076 = vmatprep.subr.bf16.mxu0 0
        %2077 = vmatpush1.bf16.msra.mxu0 0
        %2078 = vmatprep.subr.bf16.mxu0 0
        %2079 = vmatpush1.bf16.msra.mxu0 0
        %2080 = vmatprep.subr.bf16.mxu0 0
        %2081 = vmatpush1.bf16.msra.mxu0 0
        %2082 = vmatprep.subr.bf16.mxu0 0
        %2083 = vmatpush1.bf16.msra.mxu0 0
        %2084 = vmatprep.mubr.bf16.mxu0 0
        %2085 = vmatmul.mubr.bf16.gmra.mrb[0].mxu0 %v1977
        %v2086 = vpop.f32.mrb[0].mxu0
        %v2087 = vadd.f32 %v2002, %v2086
        %v2088 = vpop.f32.mrb[0].mxu0
        %v2089 = vpop.f32.mrb[0].mxu0
        %v2090 = vadd.f32 %v2002, %v2089
        %v2091 = vpop.f32.mrb[0].mxu0
        %2092 = vmatprep.mubr.bf16.mxu0 0
        %2093 = vmatmul.mubr.bf16.gmra.mrb[0].mxu0 %v1978
        %v2094 = vpop.f32.mrb[0].mxu0
        %v2095 = vadd.f32 %v2002, %v2094
        %v2096 = vpop.f32.mrb[0].mxu0
        %v2097 = vpop.f32.mrb[0].mxu0
        %v2098 = vadd.f32 %v2002, %v2097
        %v2099 = vpop.f32.mrb[0].mxu0
        %2100 = vmatprep.mubr.bf16.mxu0 0
        %2101 = vmatmul.mubr.bf16.gmra.mrb[0].mxu0 %v1979
        %v2102 = vpop.f32.mrb[0].mxu0
        %v2103 = vadd.f32 %v2002, %v2102
        %v2104 = vpop.f32.mrb[0].mxu0
        %v2105 = vpop.f32.mrb[0].mxu0
        %v2106 = vadd.f32 %v2002, %v2105
        %v2107 = vpop.f32.mrb[0].mxu0
        %2108 = vmatprep.mubr.bf16.mxu0 0
        %2109 = vmatmul.mubr.bf16.gmra.mrb[0].mxu0 %v1980
        %v2110 = vpop.f32.mrb[0].mxu0
        %v2111 = vadd.f32 %v2002, %v2110
        %v2112 = vpop.f32.mrb[0].mxu0
        %v2113 = vpop.f32.mrb[0].mxu0
        %v2114 = vadd.f32 %v2002, %v2113
        %v2115 = vpop.f32.mrb[0].mxu0
        %2116 = vdwg.mxu0
        %v2117 = vunpack.c.l.bf16 %v465
        %v2118 = vunpack.c.l.bf16 %v466
        %v2119 = vunpack.c.l.bf16 %v467
        %v2120 = vunpack.c.l.bf16 %v468
        %v2121 = vunpack.c.l.bf16 %v469
        %v2122 = vunpack.c.l.bf16 %v470
        %v2123 = vunpack.c.l.bf16 %v471
        %v2124 = vunpack.c.l.bf16 %v472
        %v2125 = vadd.f32 %v2087, %v2117
        %v2126 = vadd.f32 %v2090, %v2118
        %v2127 = vadd.f32 %v2095, %v2119
        %v2128 = vadd.f32 %v2098, %v2120
        %v2129 = vadd.f32 %v2103, %v2121
        %v2130 = vadd.f32 %v2106, %v2122
        %v2131 = vadd.f32 %v2111, %v2123
        %v2132 = vadd.f32 %v2114, %v2124
        %2133 = vst [vmem:[%s453] sm:$0xff] %v2125
        %2134 = vst [vmem:[%s453 + $0x8] sm:$0xff] %v2126
        %2135 = vst [vmem:[%s453 + $0x10] sm:$0xff] %v2127
        %2136 = vst [vmem:[%s453 + $0x18] sm:$0xff] %v2128
        %2137 = vst [vmem:[%s453 + $0x20] sm:$0xff] %v2129
        %2138 = vst [vmem:[%s453 + $0x28] sm:$0xff] %v2130
        %2139 = vst [vmem:[%s453 + $0x30] sm:$0xff] %v2131
        %2140 = vst [vmem:[%s453 + $0x38] sm:$0xff] %v2132
        %s2141 = sand.u32 %s234, 1
        %s2142 = scalar_lea.sflag [#allocation5], %s2141
        %s2143 = sand.u32 %s234, 1
        %s2144 = smul.addr %s2143, 64
        %s2145 = scalar_lea.vmem [#allocation12], %s2144
        // Predicated region
        $region69: #{tpu_custom_call.1} parent=47 // pred_check
          %p2146 = pneg %p244
        $region70: #{tpu_custom_call.1} parent=47 // pred_check_branch
          %2148 = sbr.rel (%p2146) target = $region72
        $region71: #{tpu_custom_call.1} parent=47 // pred_region
          %s2149 = smul.u32 4, %s33
          %s2151 = ssub.s32 1024, 1024
          %2152 = vsyncadd %s2142, %s2151
          %s2153 = smul.addr %s2149, 2
          %s2154 = smul.addr %s32, 32
          %s2155 = sadd.s32 %s2153, %s2154
          %s2156 = smul.addr %s2155, 128
          %s2157 = scalar_lea.hbm %s7, %s2156
          %s2158 = sshll.u32 %s2145, 4
          %s2159 = int_to_ptr.vmem [resolvable:$true] %s2158
          %2164 = dma.vmem_to_hbm [thread:$0]  %s2159, 1024, %s2157, %s2142, 128, 128, 8
        $region72: #{tpu_custom_call.1} parent=47 // pred_fallthru
          _
      $region48: #{tpu_custom_call.1} parent=5 // pred_fallthru
        _
      %p2165 = scmp.le.s32.totalorder 2, %s23
      // Predicated region
      $region73: #{tpu_custom_call.1} parent=5 // pred_check
        %p2166 = pneg %p2165
      $region74: #{tpu_custom_call.1} parent=5 // pred_check_branch
        %2168 = sbr.rel (%p2166) target = $region76
      $region75: #{tpu_custom_call.1} parent=5 // pred_region
        %s2169 = ssub.s32 %s23, 2
        // Predicated region
        $region77: #{tpu_custom_call.1} parent=75 // pred_check
          %p2170 = pneg %p250
        $region78: #{tpu_custom_call.1} parent=75 // pred_check_branch
          %2172 = sbr.rel (%p2170) target = $region80
        $region79: #{tpu_custom_call.1} parent=75 // pred_region
          %s2173 = sand.u32 %s235, 1
          %s2174 = scalar_lea.sflag [#allocation5], %s2173
          %s2175 = sand.u32 %s235, 1
          %s2176 = smul.addr %s2175, 64
          %s2177 = scalar_lea.vmem [#allocation12], %s2176
          %2178 = dma.done %s2174, 1024
        $region80: #{tpu_custom_call.1} parent=75 // pred_fallthru
          _
      $region76: #{tpu_custom_call.1} parent=5 // pred_fallthru
        _
    $region6: #{tpu_custom_call.1} parent=1 // loop_footer
      %s27 = sadd.s32 1, %s23
    $region7: #{tpu_custom_call.1} parent=1 // loop_footer_branch
      %22 = sbr.rel target = $region3
    $region8: #{tpu_custom_call.1} parent=1 // loop_exit
      _
    %2179 = vsyncpa [#allocation4], 1
    %s2180 = scalar_lea.sflag [#allocation4], 1
    %2181 = vsyncpa %s2180, 1
    %2182 = vsyncpa [#allocation7], 1
    %s2183 = scalar_lea.sflag [#allocation7], 1
    %2184 = vsyncpa %s2183, 1
    %2185 = vsyncpa [#allocation10], 1
    %2186 = vsyncpa [#allocation5], 1
    %s2187 = scalar_lea.sflag [#allocation5], 1
    %2188 = vsyncpa %s2187, 1

</llo_original>
